<compile_context>
chip_gen: v7x
topology: tpu7x:2x2x1
jax: 0.10.0
libtpu: 0.0.40
codegen_flags: <defaults>
</compile_context>

<pallas_src>
import functools

import jax
import jax.numpy as jnp
from jax import lax
from jax.experimental import pallas as pl
from jax.experimental.pallas import tpu as pltpu

LANE = 128                      # TPU lane width (used only for VMEM budgeting)
SUBLANE_BF16 = 16               # bf16 sublane packing: pad L to this multiple
MATMUL_DTYPE = jnp.bfloat16     # MXU operand dtype; accumulation stays f32
MAX_BATCH_TILE = 512
_VMEM_BUDGET = 20 * 1024 * 1024     # target per-step working set (fits all gens)
_VMEM_LIMIT = 40 * 1024 * 1024      # raised scoped limit (v5e default is 16 MiB)


def _round_up(x, m):
    return ((x + m - 1) // m) * m


def _const_spec(shape):
    """Whole-array block, identical for every grid step (weights / biases)."""
    n = len(shape)
    return pl.BlockSpec(shape, lambda i, _n=n: (0,) * _n)


def _pick_batch_tile(bs, d, lps):
    """Batch tile from a VMEM budget; >=2 grid steps when bs allows (megacore)."""
    lane_d = _round_up(d, LANE)                      # vreg lane padding in VMEM
    per_elem = 2 * 2 * sum(lps) * lane_d             # bf16 emb tiles, double-buffered
    per_elem += 6 * max(lps) * lane_d * 4            # f32 y0..y2 + shifted copies + conv
    tb = max(1, min(MAX_BATCH_TILE, _VMEM_BUDGET // max(per_elem, 1), bs))
    if bs >= 16:                                     # keep >=2 steps for v7x's 2 TCs
        tb = min(tb, _round_up((bs + 1) // 2, 8))
    if tb >= 8:
        tb = (tb // 8) * 8                           # tidy sublane-multiple batch tile
    return tb


# ----------------------------------------------------------------------------
# Single fused kernel:
#   3x [3-tap conv as three flat MXU matmuls + shifted add + ReLU + masked
#       max-pool + Linear(d,d)]  +  cosine(q,d), cosine(q,body)  +  Linear(2,1)
# ----------------------------------------------------------------------------
def cdssmtb_kernel(qe_ref, de_ref, be_ref,
                   w0_ref, w1_ref, w2_ref, convb_ref,
                   tqw_ref, tqb_ref, tdw_ref, tdb_ref, tbw_ref, tbb_ref,
                   cw_ref, ccb_ref,
                   out_ref, *, n_valid):
    w0 = w0_ref[...]                                     # (d, d) bf16
    w1 = w1_ref[...]
    w2 = w2_ref[...]
    conv_b = convb_ref[...]                              # (1, d) f32

    def seman(emb_ref, tw_ref, tb_ref, nv):
        emb = emb_ref[...]                               # (tb, Lp, d) bf16
        tbk, lp, d = emb.shape
        ef = emb.reshape(tbk * lp, d)                    # free: lp % 16 == 0
        # One 2-D MXU matmul per conv tap with M = tb*Lp, f32 accumulation.
        y0 = jnp.dot(ef, w0, preferred_element_type=jnp.float32).reshape(tbk, lp, -1)
        y1 = jnp.dot(ef, w1, preferred_element_type=jnp.float32).reshape(tbk, lp, -1)
        y2 = jnp.dot(ef, w2, preferred_element_type=jnp.float32).reshape(tbk, lp, -1)
        # Shifted-window add == Conv2d(1, d, (3, d)) over the sequence axis.
        # TODO(synk): a pltpu.roll (XLU) variant of the +1/+2 sublane slices is
        # the next step once its rotation direction is bundle-verified.
        conv = y0[:, 0:lp - 2] + y1[:, 1:lp - 1] + y2[:, 2:lp] + conv_b[None, :, :]
        conv = jnp.maximum(conv, 0.0)                    # ReLU (VPU, f32)
        if nv < lp - 2:
            # Windows touching the zero L-padding must not win the max-pool;
            # after ReLU every valid window is >= 0, so zeroing them suffices.
            widx = lax.broadcasted_iota(jnp.int32, conv.shape, 1)
            conv = jnp.where(widx < nv, conv, 0.0)
        pooled = jnp.max(conv, axis=1)                   # global max-pool -> (tb, d)
        return (jnp.dot(pooled.astype(MATMUL_DTYPE), tw_ref[...],
                        preferred_element_type=jnp.float32)
                + tb_ref[...])                           # Linear(d, d) -> (tb, d) f32

    q_sem = seman(qe_ref, tqw_ref, tqb_ref, n_valid[0])
    d_sem = seman(de_ref, tdw_ref, tdb_ref, n_valid[1])
    b_sem = seman(be_ref, tbw_ref, tbb_ref, n_valid[2])

    eps = 1e-8   # same per-norm clamp as torch.nn.functional.cosine_similarity

    def cos(x, y):
        num = jnp.sum(x * y, axis=-1, keepdims=True)
        nx = jnp.maximum(jnp.sqrt(jnp.sum(x * x, axis=-1, keepdims=True)), eps)
        ny = jnp.maximum(jnp.sqrt(jnp.sum(y * y, axis=-1, keepdims=True)), eps)
        # reciprocal runs on the (otherwise idle) EUP slot instead of a VALU divide
        return num * pl.reciprocal(nx * ny, approx=True)

    cqd = cos(q_sem, d_sem)                              # (tb, 1)
    cqb = cos(q_sem, b_sem)                              # (tb, 1)
    cw = cw_ref[...]                                     # (1, 2)
    out_ref[...] = cqd * cw[:, 0:1] + cqb * cw[:, 1:2] + ccb_ref[...]


# ----------------------------------------------------------------------------
# Wrapper: bf16 embedding gather (glue) + one fused pallas_call over the batch.
# ----------------------------------------------------------------------------
def cdssmtb_forward(kparams, inputs_q, inputs_d, inputs_dcq, inputs_dbody,
                    masks_q=None, masks_d=None, masks_dcq=None, masks_dbody=None):
    # NOTE: like the PyTorch forward, inputs_dcq and all masks are unused.
    lq, ld, lb = inputs_q.shape[1], inputs_d.shape[1], inputs_dbody.shape[1]
    for L in (lq, ld, lb):
        assert L >= 3, "conv_tri needs sequence length >= 3"

    emb_tbl = kparams['emb']                   # (vocab, d) bf16
    d = emb_tbl.shape[1]
    bs = inputs_q.shape[0]

    lps = tuple(_round_up(L, SUBLANE_BF16) for L in (lq, ld, lb))
    tb = _pick_batch_tile(bs, d, lps)
    bs_pad = _round_up(bs, tb)
    nb = bs_pad // tb

    # TODO(synk): the embedding gather stays in XLA (per-row DMA gathers would be
    # descriptor-bound at d=32); the bf16 table already halves its HBM traffic.
    def gather(tokens, lp):
        e = emb_tbl[tokens]                    # (bs, L, d) bf16
        return jnp.pad(e, ((0, bs_pad - bs), (0, lp - e.shape[1]), (0, 0)))

    q_emb = gather(inputs_q, lps[0])
    d_emb = gather(inputs_d, lps[1])
    b_emb = gather(inputs_dbody, lps[2])

    weights = (kparams['conv_w0'], kparams['conv_w1'], kparams['conv_w2'],
               kparams['conv_b'],
               kparams['trans_q_w'], kparams['trans_q_b'],
               kparams['trans_d_w'], kparams['trans_d_b'],
               kparams['trans_b_w'], kparams['trans_b_b'],
               kparams['combine_w'], kparams['combine_b'])

    kernel = functools.partial(cdssmtb_kernel, n_valid=(lq - 2, ld - 2, lb - 2))

    out = pl.pallas_call(
        kernel,
        grid=(nb,),
        in_specs=[pl.BlockSpec((tb, lps[0], d), lambda i: (i, 0, 0)),
                  pl.BlockSpec((tb, lps[1], d), lambda i: (i, 0, 0)),
                  pl.BlockSpec((tb, lps[2], d), lambda i: (i, 0, 0))]
                 + [_const_spec(w.shape) for w in weights],
        out_specs=pl.BlockSpec((tb, 1), lambda i: (i, 0)),
        out_shape=jax.ShapeDtypeStruct((bs_pad, 1), jnp.float32),
        compiler_params=pltpu.CompilerParams(
            dimension_semantics=("parallel",),     # batch axis -> megacore on v7x
            vmem_limit_bytes=_VMEM_LIMIT),
    )(q_emb, d_emb, b_emb, *weights)
    return out[:bs, 0]                           # .squeeze() -> (bs,)


# ----------------------------------------------------------------------------
# Deterministic parameter init (synthetic; dense_f / tanh are unused in forward)
# ----------------------------------------------------------------------------
def init_params(key, vocab_size, d):
    ks = jax.random.split(key, 12)
    s = 0.1
    emb = jax.random.normal(ks[0], (vocab_size, d), jnp.float32) * s
    emb = emb.at[0].set(0.0)                      # padding_idx=0
    # Conv2d(1, d, (3, d)): weight (d_out, 1, 3, d) -> three (d_in, d_out) slices
    conv_w = jax.random.normal(ks[1], (d, 3, d), jnp.float32) * s
    params = {
        'emb': emb,
        'conv_w0': conv_w[:, 0, :].T,             # (d_in, d_out)
        'conv_w1': conv_w[:, 1, :].T,
        'conv_w2': conv_w[:, 2, :].T,
        'conv_b': jax.random.normal(ks[2], (1, d), jnp.float32) * s,
        'trans_q_w': jax.random.normal(ks[3], (d, d), jnp.float32) * s,  # stored (in, out)
        'trans_q_b': jax.random.normal(ks[4], (1, d), jnp.float32) * s,
        'trans_d_w': jax.random.normal(ks[5], (d, d), jnp.float32) * s,
        'trans_d_b': jax.random.normal(ks[6], (1, d), jnp.float32) * s,
        'trans_b_w': jax.random.normal(ks[7], (d, d), jnp.float32) * s,
        'trans_b_b': jax.random.normal(ks[8], (1, d), jnp.float32) * s,
        'combine_w': jax.random.normal(ks[9], (1, 2), jnp.float32) * s,
        'combine_b': jax.random.normal(ks[10], (1, 1), jnp.float32) * s,
    }
    # TODO(synk): self.dense_f and self.tanh exist in __init__ but are never
    # used in forward(), so they are intentionally not materialized here.
    return params


def prepare_kernel_params(params):
    """Pre-cast MXU operands (embedding table + matmul weights) to bf16.

    Biases and the combine layer stay f32; the feature dim is NOT padded —
    full-dim last-axis blocks satisfy the TPU layout rule, and keeping the true
    d makes the embedding DMA move only real bytes.
    """
    b16 = lambda w: w.astype(MATMUL_DTYPE)
    return {
        'emb': b16(params['emb']),
        'conv_w0': b16(params['conv_w0']),
        'conv_w1': b16(params['conv_w1']),
        'conv_w2': b16(params['conv_w2']),
        'conv_b': params['conv_b'],
        'trans_q_w': b16(params['trans_q_w']), 'trans_q_b': params['trans_q_b'],
        'trans_d_w': b16(params['trans_d_w']), 'trans_d_b': params['trans_d_b'],
        'trans_b_w': b16(params['trans_b_w']), 'trans_b_b': params['trans_b_b'],
        'combine_w': params['combine_w'],
        'combine_b': params['combine_b'],
    }


# ----------------------------------------------------------------------------
# Pure-JAX f32 reference for correctness checking (uses the unpadded f32 params)
# ----------------------------------------------------------------------------
def reference_forward(params, iq, idoc, ibody):
    def seman(tokens, tw, tb):
        e = params['emb'][tokens]
        L = e.shape[1]
        conv = (jnp.einsum('bld,dc->blc', e[:, :L - 2], params['conv_w0'])
                + jnp.einsum('bld,dc->blc', e[:, 1:L - 1], params['conv_w1'])
                + jnp.einsum('bld,dc->blc', e[:, 2:], params['conv_w2'])
                + params['conv_b'][None])
        conv = jnp.maximum(conv, 0.0)
        pooled = jnp.max(conv, axis=1)
        return pooled @ tw + tb

    qs = seman(iq, params['trans_q_w'], params['trans_q_b'])
    ds = seman(idoc, params['trans_d_w'], params['trans_d_b'])
    bsm = seman(ibody, params['trans_b_w'], params['trans_b_b'])
    eps = 1e-8

    def cos(x, y):
        num = jnp.sum(x * y, -1)
        nx = jnp.maximum(jnp.sqrt(jnp.sum(x * x, -1)), eps)
        ny = jnp.maximum(jnp.sqrt(jnp.sum(y * y, -1)), eps)
        return num / (nx * ny)

    cw, cb = params['combine_w'], params['combine_b']
    return cos(qs, ds) * cw[0, 0] + cos(qs, bsm) * cw[0, 1] + cb[0, 0]


if __name__ == "__main__":
    key = jax.random.PRNGKey(0)
    vocab_size, d = 50, 32
    bs, lenq, lend, lendb = 2, 8, 10, 12

    kp, kq, kd, kb = jax.random.split(key, 4)
    params = init_params(kp, vocab_size, d)
    kparams = prepare_kernel_params(params)

    inputs_q = jax.random.randint(kq, (bs, lenq), 1, vocab_size, dtype=jnp.int32)
    inputs_d = jax.random.randint(kd, (bs, lend), 1, vocab_size, dtype=jnp.int32)
    inputs_dbody = jax.random.randint(kb, (bs, lendb), 1, vocab_size, dtype=jnp.int32)
    inputs_dcq = inputs_d                                  # unused in forward
    masks = [jnp.ones_like(inputs_q, dtype=jnp.float32),   # masks are unused in forward
             jnp.ones_like(inputs_d, dtype=jnp.float32),
             jnp.ones_like(inputs_d, dtype=jnp.float32),
             jnp.ones_like(inputs_dbody, dtype=jnp.float32)]

    out = cdssmtb_forward(kparams, inputs_q, inputs_d, inputs_dcq, inputs_dbody, *masks)
    out = jax.block_until_ready(out)

    ref = reference_forward(params, inputs_q, inputs_d, inputs_dbody)
    assert out.shape == (bs,), out.shape
    # Tolerance covers bf16 embeddings + bf16 MXU operands (f32 accumulation)
    # and the approximate reciprocal; tightened from the previous 2e-2.
    assert jnp.allclose(out, ref, rtol=1e-2, atol=1e-2), (out, ref)
    print("KERNEL_OK")
</pallas_src>

<mosaic_0001>
module attributes {stable_mosaic.version = 11 : i64} {
  func.func @cdssmtb_kernel(%arg0: i32, %arg1: memref<2x16x32xbf16, #tpu.memory_space<vmem>>, %arg2: memref<2x16x32xbf16, #tpu.memory_space<vmem>>, %arg3: memref<2x16x32xbf16, #tpu.memory_space<vmem>>, %arg4: memref<32x32xbf16, #tpu.memory_space<vmem>>, %arg5: memref<32x32xbf16, #tpu.memory_space<vmem>>, %arg6: memref<32x32xbf16, #tpu.memory_space<vmem>>, %arg7: memref<1x32xf32, #tpu.memory_space<vmem>>, %arg8: memref<32x32xbf16, #tpu.memory_space<vmem>>, %arg9: memref<1x32xf32, #tpu.memory_space<vmem>>, %arg10: memref<32x32xbf16, #tpu.memory_space<vmem>>, %arg11: memref<1x32xf32, #tpu.memory_space<vmem>>, %arg12: memref<32x32xbf16, #tpu.memory_space<vmem>>, %arg13: memref<1x32xf32, #tpu.memory_space<vmem>>, %arg14: memref<1x2xf32, #tpu.memory_space<vmem>>, %arg15: memref<1x1xf32, #tpu.memory_space<vmem>>, %arg16: memref<2x1xf32, #tpu.memory_space<vmem>>) attributes {dimension_semantics = [#tpu.dimension_semantics<parallel>], iteration_bounds = array<i64: 1>, scalar_prefetch = 0 : i64, scratch_operands = 0 : i64, tpu.core_type = #tpu.core_type<tc>, window_params = [{transform_indices = @transform_0, window_bounds = array<i64: 2, 16, 32>}, {transform_indices = @transform_1, window_bounds = array<i64: 2, 16, 32>}, {transform_indices = @transform_2, window_bounds = array<i64: 2, 16, 32>}, {pipeline_mode = #tpu.pipeline_mode<synchronous>, transform_indices = @transform_3, window_bounds = array<i64: 32, 32>}, {pipeline_mode = #tpu.pipeline_mode<synchronous>, transform_indices = @transform_4, window_bounds = array<i64: 32, 32>}, {pipeline_mode = #tpu.pipeline_mode<synchronous>, transform_indices = @transform_5, window_bounds = array<i64: 32, 32>}, {pipeline_mode = #tpu.pipeline_mode<synchronous>, transform_indices = @transform_6, window_bounds = array<i64: 1, 32>}, {pipeline_mode = #tpu.pipeline_mode<synchronous>, transform_indices = @transform_7, window_bounds = array<i64: 32, 32>}, {pipeline_mode = #tpu.pipeline_mode<synchronous>, transform_indices = @transform_8, window_bounds = array<i64: 1, 32>}, {pipeline_mode = #tpu.pipeline_mode<synchronous>, transform_indices = @transform_9, window_bounds = array<i64: 32, 32>}, {pipeline_mode = #tpu.pipeline_mode<synchronous>, transform_indices = @transform_10, window_bounds = array<i64: 1, 32>}, {pipeline_mode = #tpu.pipeline_mode<synchronous>, transform_indices = @transform_11, window_bounds = array<i64: 32, 32>}, {pipeline_mode = #tpu.pipeline_mode<synchronous>, transform_indices = @transform_12, window_bounds = array<i64: 1, 32>}, {pipeline_mode = #tpu.pipeline_mode<synchronous>, transform_indices = @transform_13, window_bounds = array<i64: 1, 2>}, {pipeline_mode = #tpu.pipeline_mode<synchronous>, transform_indices = @transform_14, window_bounds = array<i64: 1, 1>}, {transform_indices = @transform_15, window_bounds = array<i64: 2, 1>}]} {
    %c0 = arith.constant 0 : index
    %c0_0 = arith.constant 0 : index
    %0 = vector.load %arg4[%c0, %c0_0] : memref<32x32xbf16, #tpu.memory_space<vmem>>, vector<32x32xbf16>
    %c0_1 = arith.constant 0 : index
    %c0_2 = arith.constant 0 : index
    %1 = vector.load %arg5[%c0_1, %c0_2] : memref<32x32xbf16, #tpu.memory_space<vmem>>, vector<32x32xbf16>
    %c0_3 = arith.constant 0 : index
    %c0_4 = arith.constant 0 : index
    %2 = vector.load %arg6[%c0_3, %c0_4] : memref<32x32xbf16, #tpu.memory_space<vmem>>, vector<32x32xbf16>
    %c0_5 = arith.constant 0 : index
    %c0_6 = arith.constant 0 : index
    %3 = vector.load %arg7[%c0_5, %c0_6] : memref<1x32xf32, #tpu.memory_space<vmem>>, vector<1x32xf32>
    %c0_7 = arith.constant 0 : index
    %c0_8 = arith.constant 0 : index
    %c0_9 = arith.constant 0 : index
    %4 = vector.load %arg1[%c0_7, %c0_8, %c0_9] : memref<2x16x32xbf16, #tpu.memory_space<vmem>>, vector<2x16x32xbf16>
    %5 = vector.shape_cast %4 : vector<2x16x32xbf16> to vector<32x32xbf16>
    %cst = arith.constant dense<0.000000e+00> : vector<32x32xf32>
    %6 = tpu.matmul %5, %0, %cst {dimension_numbers = #tpu.dot_dimension_numbers<[1], [0], [0], [1], [0, 0, 1, 1], [], []>} : vector<32x32xbf16>, vector<32x32xbf16>, vector<32x32xf32> -> vector<32x32xf32>
    %7 = vector.shape_cast %6 : vector<32x32xf32> to vector<2x16x32xf32>
    %cst_10 = arith.constant dense<0.000000e+00> : vector<32x32xf32>
    %8 = tpu.matmul %5, %1, %cst_10 {dimension_numbers = #tpu.dot_dimension_numbers<[1], [0], [0], [1], [0, 0, 1, 1], [], []>} : vector<32x32xbf16>, vector<32x32xbf16>, vector<32x32xf32> -> vector<32x32xf32>
    %9 = vector.shape_cast %8 : vector<32x32xf32> to vector<2x16x32xf32>
    %cst_11 = arith.constant dense<0.000000e+00> : vector<32x32xf32>
    %10 = tpu.matmul %5, %2, %cst_11 {dimension_numbers = #tpu.dot_dimension_numbers<[1], [0], [0], [1], [0, 0, 1, 1], [], []>} : vector<32x32xbf16>, vector<32x32xbf16>, vector<32x32xf32> -> vector<32x32xf32>
    %11 = vector.shape_cast %10 : vector<32x32xf32> to vector<2x16x32xf32>
    %12 = vector.extract_strided_slice %7 {offsets = [0, 0, 0], sizes = [2, 14, 32], strides = [1, 1, 1]} : vector<2x16x32xf32> to vector<2x14x32xf32>
    %13 = vector.extract_strided_slice %9 {offsets = [0, 1, 0], sizes = [2, 14, 32], strides = [1, 1, 1]} : vector<2x16x32xf32> to vector<2x14x32xf32>
    %14 = arith.addf %12, %13 : vector<2x14x32xf32>
    %15 = vector.extract_strided_slice %11 {offsets = [0, 2, 0], sizes = [2, 14, 32], strides = [1, 1, 1]} : vector<2x16x32xf32> to vector<2x14x32xf32>
    %16 = arith.addf %14, %15 : vector<2x14x32xf32>
    %17 = vector.shape_cast %3 : vector<1x32xf32> to vector<1x1x32xf32>
    %18 = vector.broadcast %17 : vector<1x1x32xf32> to vector<2x14x32xf32>
    %19 = arith.addf %16, %18 : vector<2x14x32xf32>
    %cst_12 = arith.constant 0.000000e+00 : f32
    %20 = vector.broadcast %cst_12 : f32 to vector<2x14x32xf32>
    %21 = arith.maximumf %19, %20 : vector<2x14x32xf32>
    %22 = tpu.iota {dimensions = array<i32: 1>} : vector<2x14x32xi32>
    %c6_i32 = arith.constant 6 : i32
    %23 = vector.broadcast %c6_i32 : i32 to vector<2x14x32xi32>
    %24 = arith.cmpi slt, %22, %23 : vector<2x14x32xi32>
    %cst_13 = arith.constant 0.000000e+00 : f32
    %25 = vector.broadcast %cst_13 : f32 to vector<2x14x32xf32>
    %26 = arith.select %24, %21, %25 : vector<2x14x32xi1>, vector<2x14x32xf32>
    %cst_14 = arith.constant dense<0xFF800000> : vector<2x32xf32>
    %27 = vector.multi_reduction <maximumf>, %26, %cst_14 [1] : vector<2x14x32xf32> to vector<2x32xf32>
    %28 = arith.truncf %27 : vector<2x32xf32> to vector<2x32xbf16>
    %c0_15 = arith.constant 0 : index
    %c0_16 = arith.constant 0 : index
    %29 = vector.load %arg8[%c0_15, %c0_16] : memref<32x32xbf16, #tpu.memory_space<vmem>>, vector<32x32xbf16>
    %cst_17 = arith.constant dense<0.000000e+00> : vector<2x32xf32>
    %30 = tpu.matmul %28, %29, %cst_17 {dimension_numbers = #tpu.dot_dimension_numbers<[1], [0], [0], [1], [0, 0, 1, 1], [], []>} : vector<2x32xbf16>, vector<32x32xbf16>, vector<2x32xf32> -> vector<2x32xf32>
    %c0_18 = arith.constant 0 : index
    %c0_19 = arith.constant 0 : index
    %31 = vector.load %arg9[%c0_18, %c0_19] : memref<1x32xf32, #tpu.memory_space<vmem>>, vector<1x32xf32>
    %32 = vector.broadcast %31 : vector<1x32xf32> to vector<2x32xf32>
    %33 = arith.addf %30, %32 : vector<2x32xf32>
    %c0_20 = arith.constant 0 : index
    %c0_21 = arith.constant 0 : index
    %c0_22 = arith.constant 0 : index
    %34 = vector.load %arg2[%c0_20, %c0_21, %c0_22] : memref<2x16x32xbf16, #tpu.memory_space<vmem>>, vector<2x16x32xbf16>
    %35 = vector.shape_cast %34 : vector<2x16x32xbf16> to vector<32x32xbf16>
    %cst_23 = arith.constant dense<0.000000e+00> : vector<32x32xf32>
    %36 = tpu.matmul %35, %0, %cst_23 {dimension_numbers = #tpu.dot_dimension_numbers<[1], [0], [0], [1], [0, 0, 1, 1], [], []>} : vector<32x32xbf16>, vector<32x32xbf16>, vector<32x32xf32> -> vector<32x32xf32>
    %37 = vector.shape_cast %36 : vector<32x32xf32> to vector<2x16x32xf32>
    %cst_24 = arith.constant dense<0.000000e+00> : vector<32x32xf32>
    %38 = tpu.matmul %35, %1, %cst_24 {dimension_numbers = #tpu.dot_dimension_numbers<[1], [0], [0], [1], [0, 0, 1, 1], [], []>} : vector<32x32xbf16>, vector<32x32xbf16>, vector<32x32xf32> -> vector<32x32xf32>
    %39 = vector.shape_cast %38 : vector<32x32xf32> to vector<2x16x32xf32>
    %cst_25 = arith.constant dense<0.000000e+00> : vector<32x32xf32>
    %40 = tpu.matmul %35, %2, %cst_25 {dimension_numbers = #tpu.dot_dimension_numbers<[1], [0], [0], [1], [0, 0, 1, 1], [], []>} : vector<32x32xbf16>, vector<32x32xbf16>, vector<32x32xf32> -> vector<32x32xf32>
    %41 = vector.shape_cast %40 : vector<32x32xf32> to vector<2x16x32xf32>
    %42 = vector.extract_strided_slice %37 {offsets = [0, 0, 0], sizes = [2, 14, 32], strides = [1, 1, 1]} : vector<2x16x32xf32> to vector<2x14x32xf32>
    %43 = vector.extract_strided_slice %39 {offsets = [0, 1, 0], sizes = [2, 14, 32], strides = [1, 1, 1]} : vector<2x16x32xf32> to vector<2x14x32xf32>
    %44 = arith.addf %42, %43 : vector<2x14x32xf32>
    %45 = vector.extract_strided_slice %41 {offsets = [0, 2, 0], sizes = [2, 14, 32], strides = [1, 1, 1]} : vector<2x16x32xf32> to vector<2x14x32xf32>
    %46 = arith.addf %44, %45 : vector<2x14x32xf32>
    %47 = vector.shape_cast %3 : vector<1x32xf32> to vector<1x1x32xf32>
    %48 = vector.broadcast %47 : vector<1x1x32xf32> to vector<2x14x32xf32>
    %49 = arith.addf %46, %48 : vector<2x14x32xf32>
    %cst_26 = arith.constant 0.000000e+00 : f32
    %50 = vector.broadcast %cst_26 : f32 to vector<2x14x32xf32>
    %51 = arith.maximumf %49, %50 : vector<2x14x32xf32>
    %52 = tpu.iota {dimensions = array<i32: 1>} : vector<2x14x32xi32>
    %c8_i32 = arith.constant 8 : i32
    %53 = vector.broadcast %c8_i32 : i32 to vector<2x14x32xi32>
    %54 = arith.cmpi slt, %52, %53 : vector<2x14x32xi32>
    %cst_27 = arith.constant 0.000000e+00 : f32
    %55 = vector.broadcast %cst_27 : f32 to vector<2x14x32xf32>
    %56 = arith.select %54, %51, %55 : vector<2x14x32xi1>, vector<2x14x32xf32>
    %cst_28 = arith.constant dense<0xFF800000> : vector<2x32xf32>
    %57 = vector.multi_reduction <maximumf>, %56, %cst_28 [1] : vector<2x14x32xf32> to vector<2x32xf32>
    %58 = arith.truncf %57 : vector<2x32xf32> to vector<2x32xbf16>
    %c0_29 = arith.constant 0 : index
    %c0_30 = arith.constant 0 : index
    %59 = vector.load %arg10[%c0_29, %c0_30] : memref<32x32xbf16, #tpu.memory_space<vmem>>, vector<32x32xbf16>
    %cst_31 = arith.constant dense<0.000000e+00> : vector<2x32xf32>
    %60 = tpu.matmul %58, %59, %cst_31 {dimension_numbers = #tpu.dot_dimension_numbers<[1], [0], [0], [1], [0, 0, 1, 1], [], []>} : vector<2x32xbf16>, vector<32x32xbf16>, vector<2x32xf32> -> vector<2x32xf32>
    %c0_32 = arith.constant 0 : index
    %c0_33 = arith.constant 0 : index
    %61 = vector.load %arg11[%c0_32, %c0_33] : memref<1x32xf32, #tpu.memory_space<vmem>>, vector<1x32xf32>
    %62 = vector.broadcast %61 : vector<1x32xf32> to vector<2x32xf32>
    %63 = arith.addf %60, %62 : vector<2x32xf32>
    %c0_34 = arith.constant 0 : index
    %c0_35 = arith.constant 0 : index
    %c0_36 = arith.constant 0 : index
    %64 = vector.load %arg3[%c0_34, %c0_35, %c0_36] : memref<2x16x32xbf16, #tpu.memory_space<vmem>>, vector<2x16x32xbf16>
    %65 = vector.shape_cast %64 : vector<2x16x32xbf16> to vector<32x32xbf16>
    %cst_37 = arith.constant dense<0.000000e+00> : vector<32x32xf32>
    %66 = tpu.matmul %65, %0, %cst_37 {dimension_numbers = #tpu.dot_dimension_numbers<[1], [0], [0], [1], [0, 0, 1, 1], [], []>} : vector<32x32xbf16>, vector<32x32xbf16>, vector<32x32xf32> -> vector<32x32xf32>
    %67 = vector.shape_cast %66 : vector<32x32xf32> to vector<2x16x32xf32>
    %cst_38 = arith.constant dense<0.000000e+00> : vector<32x32xf32>
    %68 = tpu.matmul %65, %1, %cst_38 {dimension_numbers = #tpu.dot_dimension_numbers<[1], [0], [0], [1], [0, 0, 1, 1], [], []>} : vector<32x32xbf16>, vector<32x32xbf16>, vector<32x32xf32> -> vector<32x32xf32>
    %69 = vector.shape_cast %68 : vector<32x32xf32> to vector<2x16x32xf32>
    %cst_39 = arith.constant dense<0.000000e+00> : vector<32x32xf32>
    %70 = tpu.matmul %65, %2, %cst_39 {dimension_numbers = #tpu.dot_dimension_numbers<[1], [0], [0], [1], [0, 0, 1, 1], [], []>} : vector<32x32xbf16>, vector<32x32xbf16>, vector<32x32xf32> -> vector<32x32xf32>
    %71 = vector.shape_cast %70 : vector<32x32xf32> to vector<2x16x32xf32>
    %72 = vector.extract_strided_slice %67 {offsets = [0, 0, 0], sizes = [2, 14, 32], strides = [1, 1, 1]} : vector<2x16x32xf32> to vector<2x14x32xf32>
    %73 = vector.extract_strided_slice %69 {offsets = [0, 1, 0], sizes = [2, 14, 32], strides = [1, 1, 1]} : vector<2x16x32xf32> to vector<2x14x32xf32>
    %74 = arith.addf %72, %73 : vector<2x14x32xf32>
    %75 = vector.extract_strided_slice %71 {offsets = [0, 2, 0], sizes = [2, 14, 32], strides = [1, 1, 1]} : vector<2x16x32xf32> to vector<2x14x32xf32>
    %76 = arith.addf %74, %75 : vector<2x14x32xf32>
    %77 = vector.shape_cast %3 : vector<1x32xf32> to vector<1x1x32xf32>
    %78 = vector.broadcast %77 : vector<1x1x32xf32> to vector<2x14x32xf32>
    %79 = arith.addf %76, %78 : vector<2x14x32xf32>
    %cst_40 = arith.constant 0.000000e+00 : f32
    %80 = vector.broadcast %cst_40 : f32 to vector<2x14x32xf32>
    %81 = arith.maximumf %79, %80 : vector<2x14x32xf32>
    %82 = tpu.iota {dimensions = array<i32: 1>} : vector<2x14x32xi32>
    %c10_i32 = arith.constant 10 : i32
    %83 = vector.broadcast %c10_i32 : i32 to vector<2x14x32xi32>
    %84 = arith.cmpi slt, %82, %83 : vector<2x14x32xi32>
    %cst_41 = arith.constant 0.000000e+00 : f32
    %85 = vector.broadcast %cst_41 : f32 to vector<2x14x32xf32>
    %86 = arith.select %84, %81, %85 : vector<2x14x32xi1>, vector<2x14x32xf32>
    %cst_42 = arith.constant dense<0xFF800000> : vector<2x32xf32>
    %87 = vector.multi_reduction <maximumf>, %86, %cst_42 [1] : vector<2x14x32xf32> to vector<2x32xf32>
    %88 = arith.truncf %87 : vector<2x32xf32> to vector<2x32xbf16>
    %c0_43 = arith.constant 0 : index
    %c0_44 = arith.constant 0 : index
    %89 = vector.load %arg12[%c0_43, %c0_44] : memref<32x32xbf16, #tpu.memory_space<vmem>>, vector<32x32xbf16>
    %cst_45 = arith.constant dense<0.000000e+00> : vector<2x32xf32>
    %90 = tpu.matmul %88, %89, %cst_45 {dimension_numbers = #tpu.dot_dimension_numbers<[1], [0], [0], [1], [0, 0, 1, 1], [], []>} : vector<2x32xbf16>, vector<32x32xbf16>, vector<2x32xf32> -> vector<2x32xf32>
    %c0_46 = arith.constant 0 : index
    %c0_47 = arith.constant 0 : index
    %91 = vector.load %arg13[%c0_46, %c0_47] : memref<1x32xf32, #tpu.memory_space<vmem>>, vector<1x32xf32>
    %92 = vector.broadcast %91 : vector<1x32xf32> to vector<2x32xf32>
    %93 = arith.addf %90, %92 : vector<2x32xf32>
    %94 = arith.mulf %33, %63 : vector<2x32xf32>
    %cst_48 = arith.constant dense<0.000000e+00> : vector<2xf32>
    %95 = vector.multi_reduction <add>, %94, %cst_48 [1] : vector<2x32xf32> to vector<2xf32>
    %96 = vector.shape_cast %95 : vector<2xf32> to vector<2x1xf32>
    %97 = arith.mulf %33, %33 : vector<2x32xf32>
    %cst_49 = arith.constant dense<0.000000e+00> : vector<2xf32>
    %98 = vector.multi_reduction <add>, %97, %cst_49 [1] : vector<2x32xf32> to vector<2xf32>
    %99 = vector.shape_cast %98 : vector<2xf32> to vector<2x1xf32>
    %100 = math.sqrt %99 : vector<2x1xf32>
    %cst_50 = arith.constant 9.99999993E-9 : f32
    %101 = vector.broadcast %cst_50 : f32 to vector<2x1xf32>
    %102 = arith.maximumf %100, %101 : vector<2x1xf32>
    %103 = arith.mulf %63, %63 : vector<2x32xf32>
    %cst_51 = arith.constant dense<0.000000e+00> : vector<2xf32>
    %104 = vector.multi_reduction <add>, %103, %cst_51 [1] : vector<2x32xf32> to vector<2xf32>
    %105 = vector.shape_cast %104 : vector<2xf32> to vector<2x1xf32>
    %106 = math.sqrt %105 : vector<2x1xf32>
    %cst_52 = arith.constant 9.99999993E-9 : f32
    %107 = vector.broadcast %cst_52 : f32 to vector<2x1xf32>
    %108 = arith.maximumf %106, %107 : vector<2x1xf32>
    %109 = arith.mulf %102, %108 : vector<2x1xf32>
    %110 = tpu.reciprocal %109 {approx = true} : vector<2x1xf32> -> vector<2x1xf32>
    %111 = arith.mulf %96, %110 : vector<2x1xf32>
    %112 = arith.mulf %33, %93 : vector<2x32xf32>
    %cst_53 = arith.constant dense<0.000000e+00> : vector<2xf32>
    %113 = vector.multi_reduction <add>, %112, %cst_53 [1] : vector<2x32xf32> to vector<2xf32>
    %114 = vector.shape_cast %113 : vector<2xf32> to vector<2x1xf32>
    %115 = arith.mulf %33, %33 : vector<2x32xf32>
    %cst_54 = arith.constant dense<0.000000e+00> : vector<2xf32>
    %116 = vector.multi_reduction <add>, %115, %cst_54 [1] : vector<2x32xf32> to vector<2xf32>
    %117 = vector.shape_cast %116 : vector<2xf32> to vector<2x1xf32>
    %118 = math.sqrt %117 : vector<2x1xf32>
    %cst_55 = arith.constant 9.99999993E-9 : f32
    %119 = vector.broadcast %cst_55 : f32 to vector<2x1xf32>
    %120 = arith.maximumf %118, %119 : vector<2x1xf32>
    %121 = arith.mulf %93, %93 : vector<2x32xf32>
    %cst_56 = arith.constant dense<0.000000e+00> : vector<2xf32>
    %122 = vector.multi_reduction <add>, %121, %cst_56 [1] : vector<2x32xf32> to vector<2xf32>
    %123 = vector.shape_cast %122 : vector<2xf32> to vector<2x1xf32>
    %124 = math.sqrt %123 : vector<2x1xf32>
    %cst_57 = arith.constant 9.99999993E-9 : f32
    %125 = vector.broadcast %cst_57 : f32 to vector<2x1xf32>
    %126 = arith.maximumf %124, %125 : vector<2x1xf32>
    %127 = arith.mulf %120, %126 : vector<2x1xf32>
    %128 = tpu.reciprocal %127 {approx = true} : vector<2x1xf32> -> vector<2x1xf32>
    %129 = arith.mulf %114, %128 : vector<2x1xf32>
    %c0_58 = arith.constant 0 : index
    %c0_59 = arith.constant 0 : index
    %130 = vector.load %arg14[%c0_58, %c0_59] : memref<1x2xf32, #tpu.memory_space<vmem>>, vector<1x2xf32>
    %131 = vector.extract_strided_slice %130 {offsets = [0, 0], sizes = [1, 1], strides = [1, 1]} : vector<1x2xf32> to vector<1x1xf32>
    %132 = vector.broadcast %131 : vector<1x1xf32> to vector<2x1xf32>
    %133 = arith.mulf %111, %132 : vector<2x1xf32>
    %134 = vector.extract_strided_slice %130 {offsets = [0, 1], sizes = [1, 1], strides = [1, 1]} : vector<1x2xf32> to vector<1x1xf32>
    %135 = vector.broadcast %134 : vector<1x1xf32> to vector<2x1xf32>
    %136 = arith.mulf %129, %135 : vector<2x1xf32>
    %137 = arith.addf %133, %136 : vector<2x1xf32>
    %c0_60 = arith.constant 0 : index
    %c0_61 = arith.constant 0 : index
    %138 = vector.load %arg15[%c0_60, %c0_61] : memref<1x1xf32, #tpu.memory_space<vmem>>, vector<1x1xf32>
    %139 = vector.broadcast %138 : vector<1x1xf32> to vector<2x1xf32>
    %140 = arith.addf %137, %139 : vector<2x1xf32>
    %c0_62 = arith.constant 0 : index
    %c0_63 = arith.constant 0 : index
    %141 = vector.load %arg16[%c0_62, %c0_63] : memref<2x1xf32, #tpu.memory_space<vmem>>, vector<2x1xf32>
    tpu.vector_store %arg16[%c0_62, %c0_63], %140 {strides = array<i32>} : memref<2x1xf32, #tpu.memory_space<vmem>>, vector<2x1xf32>,
    return
  }
  func.func @transform_0(%arg0: i32) -> (i32, i32, i32) {
    %c0_i32 = arith.constant 0 : i32
    %c0_i32_0 = arith.constant 0 : i32
    %c0_i32_1 = arith.constant 0 : i32
    return %arg0, %c0_i32, %c0_i32_0 : i32, i32, i32
  }
  func.func @transform_1(%arg0: i32) -> (i32, i32, i32) {
    %c0_i32 = arith.constant 0 : i32
    %c0_i32_0 = arith.constant 0 : i32
    %c0_i32_1 = arith.constant 0 : i32
    return %arg0, %c0_i32, %c0_i32_0 : i32, i32, i32
  }
  func.func @transform_2(%arg0: i32) -> (i32, i32, i32) {
    %c0_i32 = arith.constant 0 : i32
    %c0_i32_0 = arith.constant 0 : i32
    %c0_i32_1 = arith.constant 0 : i32
    return %arg0, %c0_i32, %c0_i32_0 : i32, i32, i32
  }
  func.func @transform_3(%arg0: i32) -> (i32, i32) {
    %c0_i32 = arith.constant 0 : i32
    %c0_i32_0 = arith.constant 0 : i32
    %c0_i32_1 = arith.constant 0 : i32
    return %c0_i32, %c0_i32_0 : i32, i32
  }
  func.func @transform_4(%arg0: i32) -> (i32, i32) {
    %c0_i32 = arith.constant 0 : i32
    %c0_i32_0 = arith.constant 0 : i32
    %c0_i32_1 = arith.constant 0 : i32
    return %c0_i32, %c0_i32_0 : i32, i32
  }
  func.func @transform_5(%arg0: i32) -> (i32, i32) {
    %c0_i32 = arith.constant 0 : i32
    %c0_i32_0 = arith.constant 0 : i32
    %c0_i32_1 = arith.constant 0 : i32
    return %c0_i32, %c0_i32_0 : i32, i32
  }
  func.func @transform_6(%arg0: i32) -> (i32, i32) {
    %c0_i32 = arith.constant 0 : i32
    %c0_i32_0 = arith.constant 0 : i32
    %c0_i32_1 = arith.constant 0 : i32
    return %c0_i32, %c0_i32_0 : i32, i32
  }
  func.func @transform_7(%arg0: i32) -> (i32, i32) {
    %c0_i32 = arith.constant 0 : i32
    %c0_i32_0 = arith.constant 0 : i32
    %c0_i32_1 = arith.constant 0 : i32
    return %c0_i32, %c0_i32_0 : i32, i32
  }
  func.func @transform_8(%arg0: i32) -> (i32, i32) {
    %c0_i32 = arith.constant 0 : i32
    %c0_i32_0 = arith.constant 0 : i32
    %c0_i32_1 = arith.constant 0 : i32
    return %c0_i32, %c0_i32_0 : i32, i32
  }
  func.func @transform_9(%arg0: i32) -> (i32, i32) {
    %c0_i32 = arith.constant 0 : i32
    %c0_i32_0 = arith.constant 0 : i32
    %c0_i32_1 = arith.constant 0 : i32
    return %c0_i32, %c0_i32_0 : i32, i32
  }
  func.func @transform_10(%arg0: i32) -> (i32, i32) {
    %c0_i32 = arith.constant 0 : i32
    %c0_i32_0 = arith.constant 0 : i32
    %c0_i32_1 = arith.constant 0 : i32
    return %c0_i32, %c0_i32_0 : i32, i32
  }
  func.func @transform_11(%arg0: i32) -> (i32, i32) {
    %c0_i32 = arith.constant 0 : i32
    %c0_i32_0 = arith.constant 0 : i32
    %c0_i32_1 = arith.constant 0 : i32
    return %c0_i32, %c0_i32_0 : i32, i32
  }
  func.func @transform_12(%arg0: i32) -> (i32, i32) {
    %c0_i32 = arith.constant 0 : i32
    %c0_i32_0 = arith.constant 0 : i32
    %c0_i32_1 = arith.constant 0 : i32
    return %c0_i32, %c0_i32_0 : i32, i32
  }
  func.func @transform_13(%arg0: i32) -> (i32, i32) {
    %c0_i32 = arith.constant 0 : i32
    %c0_i32_0 = arith.constant 0 : i32
    %c0_i32_1 = arith.constant 0 : i32
    return %c0_i32, %c0_i32_0 : i32, i32
  }
  func.func @transform_14(%arg0: i32) -> (i32, i32) {
    %c0_i32 = arith.constant 0 : i32
    %c0_i32_0 = arith.constant 0 : i32
    %c0_i32_1 = arith.constant 0 : i32
    return %c0_i32, %c0_i32_0 : i32, i32
  }
  func.func @transform_15(%arg0: i32) -> (i32, i32) {
    %c0_i32 = arith.constant 0 : i32
    %c0_i32_0 = arith.constant 0 : i32
    return %arg0, %c0_i32 : i32, i32
  }
}

</mosaic_0001>

<llo_original>
// kernel: tpu_custom_call.1
$region0: #{tpu_custom_call.1}
  #allocation0 [shape = 'u32[]', space=smem, size = 0x4, offset = 0x4, fixed_abs, tag = 'smem constant byte address 0x4 - core index']
  #allocation1 [shape = 'u32[144,128]{1,0:T(1,128)}', space=vmem, size = 0x12000, scoped, tag = 'internal scratch']
  #allocation2 [shape = 'f32[1,1]{1,0:T(1,128)S(1)}', space=vmem, size = 0x200, scoped, tag = 'scoped memory for tpu_custom_call.1']
  %s0 = inlined_call_operand.hbm [shape: bf16[2,16,32], index: 0, kind: input, shape index: {}]
  %s1 = inlined_call_operand.hbm [shape: bf16[2,16,32], index: 1, kind: input, shape index: {}]
  %s2 = inlined_call_operand.hbm [shape: bf16[2,16,32], index: 2, kind: input, shape index: {}]
  %s3 = inlined_call_operand.hbm [shape: bf16[32,32], index: 3, kind: input, shape index: {}]
  %s4 = inlined_call_operand.vmem [shape: bf16[32,32], index: 4, kind: input, shape index: {}]
  %s5 = inlined_call_operand.hbm [shape: bf16[32,32], index: 5, kind: input, shape index: {}]
  %s6 = inlined_call_operand.vmem [shape: f32[1,32], index: 6, kind: input, shape index: {}]
  %s7 = inlined_call_operand.hbm [shape: bf16[32,32], index: 7, kind: input, shape index: {}]
  %s8 = inlined_call_operand.vmem [shape: f32[1,32], index: 8, kind: input, shape index: {}]
  %s9 = inlined_call_operand.vmem [shape: bf16[32,32], index: 9, kind: input, shape index: {}]
  %s10 = inlined_call_operand.vmem [shape: f32[1,32], index: 10, kind: input, shape index: {}]
  %s11 = inlined_call_operand.hbm [shape: bf16[32,32], index: 11, kind: input, shape index: {}]
  %s12 = inlined_call_operand.vmem [shape: f32[1,32], index: 12, kind: input, shape index: {}]
  %s13 = inlined_call_operand.vmem [shape: f32[1,2], index: 13, kind: input, shape index: {}]
  %s14 = inlined_call_operand.<no memory space> [shape: f32[1,1], index: 14, kind: input, shape index: {}]
  %s15 = inlined_call_operand.vmem [shape: f32[2,1], index: 15, kind: output, shape index: {}]
  %s16 = sld [smem:[#allocation0]]
  $region98: #{tpu_custom_call.1} parent=0
    _
  %s18 = ssub.s32 1, %s16
  %s19 = scalar_select 0, %s18, %s16
  %v20 = vstv %s14
  %21 = vst [vmem:[#allocation2] sm:$0x1] %v20
  $region1: #{tpu_custom_call.1} parent=0
    #allocation3 [shape = 'u8[8192]{0}', space=vmem, size = 0x2000, scoped, tag = 'input window, operand 0, single buffered']
    #allocation4 [shape = 's32[1]{0}', space=sflag, size = 0x4, scoped, tag = 'scoped memory for tpu_custom_call.1']
    #allocation5 [shape = 'u8[8192]{0}', space=vmem, size = 0x2000, scoped, tag = 'input window, operand 1, single buffered']
    #allocation6 [shape = 's32[1]{0}', space=sflag, size = 0x4, scoped, tag = 'scoped memory for tpu_custom_call.1']
    #allocation7 [shape = 'u8[8192]{0}', space=vmem, size = 0x2000, scoped, tag = 'input window, operand 2, single buffered']
    #allocation8 [shape = 'u8[8192]{0}', space=vmem, size = 0x2000, scoped, tag = 'input window, operand 3, single buffered']
    #allocation9 [shape = 's32[1]{0}', space=sflag, size = 0x4, scoped, tag = 'scoped memory for tpu_custom_call.1']
    #allocation10 [shape = 'u8[8192]{0}', space=vmem, size = 0x2000, scoped, tag = 'input window, operand 5, single buffered']
    #allocation11 [shape = 'u8[8192]{0}', space=vmem, size = 0x2000, scoped, tag = 'input window, operand 7, single buffered']
    #allocation12 [shape = 's32[1]{0}', space=sflag, size = 0x4, scoped, tag = 'scoped memory for tpu_custom_call.1']
    #allocation13 [shape = 'u8[8192]{0}', space=vmem, size = 0x2000, scoped, tag = 'input window, operand 11, single buffered']
    %22 = vsyncpa [#allocation4], 0
    %23 = vsyncpa [#allocation6], 0
    %24 = vsyncpa [#allocation9], 0
    %25 = vsyncpa [#allocation12], 0
    // Predicated region
    $region2: #{tpu_custom_call.1} parent=1 // pred_check
      _
    $region3: #{tpu_custom_call.1} parent=1 // pred_check_branch
      %27 = sbr.rel (0) target = $region5
    $region4: #{tpu_custom_call.1} parent=1 // pred_region
      %s29 = ssub.s32 256, 256
      %30 = vsyncadd [#allocation4], %s29
      %s31 = sshll.u32 [#allocation3], 4
      %s32 = int_to_ptr.vmem [resolvable:$true] %s31
      %37 = dma.hbm_to_vmem [thread:$0]  %s0, 256, %s32, [#allocation4], 64, 64, 4
    $region5: #{tpu_custom_call.1} parent=1 // pred_fallthru
      _
    // Predicated region
    $region6: #{tpu_custom_call.1} parent=1 // pred_check
      _
    $region7: #{tpu_custom_call.1} parent=1 // pred_check_branch
      %39 = sbr.rel (0) target = $region9
    $region8: #{tpu_custom_call.1} parent=1 // pred_region
      %s41 = ssub.s32 256, 256
      %42 = vsyncadd [#allocation6], %s41
      %s43 = sshll.u32 [#allocation5], 4
      %s44 = int_to_ptr.vmem [resolvable:$true] %s43
      %49 = dma.hbm_to_vmem [thread:$0]  %s1, 256, %s44, [#allocation6], 64, 64, 4
    $region9: #{tpu_custom_call.1} parent=1 // pred_fallthru
      _
    // Predicated region
    $region10: #{tpu_custom_call.1} parent=1 // pred_check
      _
    $region11: #{tpu_custom_call.1} parent=1 // pred_check_branch
      %51 = sbr.rel (0) target = $region13
    $region12: #{tpu_custom_call.1} parent=1 // pred_region
      %s53 = ssub.s32 256, 256
      %54 = vsyncadd [#allocation6], %s53
      %s55 = sshll.u32 [#allocation7], 4
      %s56 = int_to_ptr.vmem [resolvable:$true] %s55
      %61 = dma.hbm_to_vmem [thread:$0]  %s2, 256, %s56, [#allocation6], 64, 64, 4
    $region13: #{tpu_custom_call.1} parent=1 // pred_fallthru
      _
    // Predicated region
    $region14: #{tpu_custom_call.1} parent=1 // pred_check
      _
    $region15: #{tpu_custom_call.1} parent=1 // pred_check_branch
      %63 = sbr.rel (0) target = $region17
    $region16: #{tpu_custom_call.1} parent=1 // pred_region
      %s65 = ssub.s32 256, 256
      %66 = vsyncadd [#allocation9], %s65
      %s67 = sshll.u32 [#allocation8], 4
      %s68 = int_to_ptr.vmem [resolvable:$true] %s67
      %73 = dma.hbm_to_vmem [thread:$0]  %s3, 256, %s68, [#allocation9], 64, 64, 4
    $region17: #{tpu_custom_call.1} parent=1 // pred_fallthru
      _
    // Predicated region
    $region18: #{tpu_custom_call.1} parent=1 // pred_check
      _
    $region19: #{tpu_custom_call.1} parent=1 // pred_check_branch
      %75 = sbr.rel (0) target = $region21
    $region20: #{tpu_custom_call.1} parent=1 // pred_region
      _
    $region21: #{tpu_custom_call.1} parent=1 // pred_fallthru
      _
    // Predicated region
    $region22: #{tpu_custom_call.1} parent=1 // pred_check
      _
    $region23: #{tpu_custom_call.1} parent=1 // pred_check_branch
      %77 = sbr.rel (0) target = $region25
    $region24: #{tpu_custom_call.1} parent=1 // pred_region
      %s79 = ssub.s32 256, 256
      %80 = vsyncadd [#allocation9], %s79
      %s81 = sshll.u32 [#allocation10], 4
      %s82 = int_to_ptr.vmem [resolvable:$true] %s81
      %87 = dma.hbm_to_vmem [thread:$0]  %s5, 256, %s82, [#allocation9], 64, 64, 4
    $region25: #{tpu_custom_call.1} parent=1 // pred_fallthru
      _
    // Predicated region
    $region26: #{tpu_custom_call.1} parent=1 // pred_check
      _
    $region27: #{tpu_custom_call.1} parent=1 // pred_check_branch
      %89 = sbr.rel (0) target = $region29
    $region28: #{tpu_custom_call.1} parent=1 // pred_region
      _
    $region29: #{tpu_custom_call.1} parent=1 // pred_fallthru
      _
    // Predicated region
    $region30: #{tpu_custom_call.1} parent=1 // pred_check
      _
    $region31: #{tpu_custom_call.1} parent=1 // pred_check_branch
      %91 = sbr.rel (0) target = $region33
    $region32: #{tpu_custom_call.1} parent=1 // pred_region
      %s93 = ssub.s32 256, 256
      %94 = vsyncadd [#allocation12], %s93
      %s95 = sshll.u32 [#allocation11], 4
      %s96 = int_to_ptr.vmem [resolvable:$true] %s95
      %101 = dma.hbm_to_vmem [thread:$0]  %s7, 256, %s96, [#allocation12], 64, 64, 4
    $region33: #{tpu_custom_call.1} parent=1 // pred_fallthru
      _
    // Predicated region
    $region34: #{tpu_custom_call.1} parent=1 // pred_check
      _
    $region35: #{tpu_custom_call.1} parent=1 // pred_check_branch
      %103 = sbr.rel (0) target = $region37
    $region36: #{tpu_custom_call.1} parent=1 // pred_region
      _
    $region37: #{tpu_custom_call.1} parent=1 // pred_fallthru
      _
    // Predicated region
    $region38: #{tpu_custom_call.1} parent=1 // pred_check
      _
    $region39: #{tpu_custom_call.1} parent=1 // pred_check_branch
      %105 = sbr.rel (0) target = $region41
    $region40: #{tpu_custom_call.1} parent=1 // pred_region
      _
    $region41: #{tpu_custom_call.1} parent=1 // pred_fallthru
      _
    // Predicated region
    $region42: #{tpu_custom_call.1} parent=1 // pred_check
      _
    $region43: #{tpu_custom_call.1} parent=1 // pred_check_branch
      %107 = sbr.rel (0) target = $region45
    $region44: #{tpu_custom_call.1} parent=1 // pred_region
      _
    $region45: #{tpu_custom_call.1} parent=1 // pred_fallthru
      _
    // Predicated region
    $region46: #{tpu_custom_call.1} parent=1 // pred_check
      _
    $region47: #{tpu_custom_call.1} parent=1 // pred_check_branch
      %109 = sbr.rel (0) target = $region49
    $region48: #{tpu_custom_call.1} parent=1 // pred_region
      %s111 = ssub.s32 256, 256
      %112 = vsyncadd [#allocation12], %s111
      %s113 = sshll.u32 [#allocation13], 4
      %s114 = int_to_ptr.vmem [resolvable:$true] %s113
      %119 = dma.hbm_to_vmem [thread:$0]  %s11, 256, %s114, [#allocation12], 64, 64, 4
    $region49: #{tpu_custom_call.1} parent=1 // pred_fallthru
      _
    // Predicated region
    $region50: #{tpu_custom_call.1} parent=1 // pred_check
      _
    $region51: #{tpu_custom_call.1} parent=1 // pred_check_branch
      %121 = sbr.rel (0) target = $region53
    $region52: #{tpu_custom_call.1} parent=1 // pred_region
      _
    $region53: #{tpu_custom_call.1} parent=1 // pred_fallthru
      _
    // Predicated region
    $region54: #{tpu_custom_call.1} parent=1 // pred_check
      _
    $region55: #{tpu_custom_call.1} parent=1 // pred_check_branch
      %123 = sbr.rel (0) target = $region57
    $region56: #{tpu_custom_call.1} parent=1 // pred_region
      _
    $region57: #{tpu_custom_call.1} parent=1 // pred_fallthru
      _
    // Predicated region
    $region58: #{tpu_custom_call.1} parent=1 // pred_check
      _
    $region59: #{tpu_custom_call.1} parent=1 // pred_check_branch
      %125 = sbr.rel (0) target = $region61
    $region60: #{tpu_custom_call.1} parent=1 // pred_region
      _
    $region61: #{tpu_custom_call.1} parent=1 // pred_fallthru
      _
    // Predicated region
    $region62: #{tpu_custom_call.1} parent=1 // pred_check
      _
    $region63: #{tpu_custom_call.1} parent=1 // pred_check_branch
      %127 = sbr.rel (0) target = $region65
    $region64: #{tpu_custom_call.1} parent=1 // pred_region
      %128 = dma.done [#allocation4], 256
    $region65: #{tpu_custom_call.1} parent=1 // pred_fallthru
      _
    // Predicated region
    $region66: #{tpu_custom_call.1} parent=1 // pred_check
      _
    $region67: #{tpu_custom_call.1} parent=1 // pred_check_branch
      %130 = sbr.rel (0) target = $region69
    $region68: #{tpu_custom_call.1} parent=1 // pred_region
      %131 = dma.done [#allocation6], 256
    $region69: #{tpu_custom_call.1} parent=1 // pred_fallthru
      _
    // Predicated region
    $region70: #{tpu_custom_call.1} parent=1 // pred_check
      _
    $region71: #{tpu_custom_call.1} parent=1 // pred_check_branch
      %133 = sbr.rel (0) target = $region73
    $region72: #{tpu_custom_call.1} parent=1 // pred_region
      %134 = dma.done [#allocation6], 256
    $region73: #{tpu_custom_call.1} parent=1 // pred_fallthru
      _
    // Predicated region
    $region74: #{tpu_custom_call.1} parent=1 // pred_check
      _
    $region75: #{tpu_custom_call.1} parent=1 // pred_check_branch
      %136 = sbr.rel (0) target = $region77
    $region76: #{tpu_custom_call.1} parent=1 // pred_region
      %137 = dma.done [#allocation9], 256
    $region77: #{tpu_custom_call.1} parent=1 // pred_fallthru
      _
    // Predicated region
    $region78: #{tpu_custom_call.1} parent=1 // pred_check
      _
    $region79: #{tpu_custom_call.1} parent=1 // pred_check_branch
      %139 = sbr.rel (0) target = $region81
    $region80: #{tpu_custom_call.1} parent=1 // pred_region
      %140 = dma.done [#allocation9], 256
    $region81: #{tpu_custom_call.1} parent=1 // pred_fallthru
      _
    // Predicated region
    $region82: #{tpu_custom_call.1} parent=1 // pred_check
      _
    $region83: #{tpu_custom_call.1} parent=1 // pred_check_branch
      %142 = sbr.rel (0) target = $region85
    $region84: #{tpu_custom_call.1} parent=1 // pred_region
      %143 = dma.done [#allocation12], 256
    $region85: #{tpu_custom_call.1} parent=1 // pred_fallthru
      _
    // Predicated region
    $region86: #{tpu_custom_call.1} parent=1 // pred_check
      _
    $region87: #{tpu_custom_call.1} parent=1 // pred_check_branch
      %145 = sbr.rel (0) target = $region89
    $region88: #{tpu_custom_call.1} parent=1 // pred_region
      %146 = dma.done [#allocation12], 256
    $region89: #{tpu_custom_call.1} parent=1 // pred_fallthru
      _
    %v148 = vld [vmem:[#allocation8] sm:$0xf]
    %v149 = vld [vmem:[#allocation8 + $0x4] sm:$0xf]
    %v150 = vld [vmem:[#allocation8 + $0x8] sm:$0xf]
    %v151 = vld [vmem:[#allocation8 + $0xc] sm:$0xf]
    %v152 = vld [vmem:[%s4] sm:$0xf]
    %v153 = vld [vmem:[%s4 + $0x4] sm:$0xf]
    %v154 = vld [vmem:[%s4 + $0x8] sm:$0xf]
    %v155 = vld [vmem:[%s4 + $0xc] sm:$0xf]
    %v156 = vld [vmem:[#allocation10] sm:$0xf]
    %v157 = vld [vmem:[#allocation10 + $0x4] sm:$0xf]
    %v158 = vld [vmem:[#allocation10 + $0x8] sm:$0xf]
    %v159 = vld [vmem:[#allocation10 + $0xc] sm:$0xf]
    %v160 = vld [vmem:[%s6] sm:$0x1]
    %v161 = vld [vmem:[#allocation3] sm:$0xf]
    %v162 = vld [vmem:[#allocation3 + $0x4] sm:$0xf]
    %v163 = vld [vmem:[#allocation3 + $0x8] sm:$0xf]
    %v164 = vld [vmem:[#allocation3 + $0xc] sm:$0xf]
    %v169 = vunpack.c.l.b16 %v161
    %v170 = vunpack.c.l.b16 %v162
    %v171 = vunpack.c.l.b16 %v163
    %v172 = vunpack.c.l.b16 %v164
    %v173 = vpack.c.b16 %v170, %v169
    %v174 = vpack.c.b16 %v172, %v171
    %v179 = vunpack.c.l.b16 %v148
    %v180 = vunpack.c.l.b16 %v149
    %v181 = vunpack.c.l.b16 %v150
    %v182 = vunpack.c.l.b16 %v151
    %v183 = vpack.c.b16 %v180, %v179
    %v184 = vpack.c.b16 %v182, %v181
    %vm187 = vcmask 261120
    %v189 = vsel %vm187, %v173, 0
    %v192 = vsel %vm187, %v174, 0
    %194 = vmatprep.subr.bf16.mxu0 0
    %195 = vmatpush1.bf16.msra.mxu0 %v183
    %196 = vmatprep.subr.bf16.mxu0 0
    %197 = vmatpush1.bf16.msra.mxu0 %v184
    %198 = vmatprep.subr.bf16.mxu0 0
    %199 = vmatpush1.bf16.msra.mxu0 0
    %200 = vmatprep.subr.bf16.mxu0 0
    %201 = vmatpush1.bf16.msra.mxu0 0
    %202 = vmatprep.subr.bf16.mxu0 0
    %203 = vmatpush1.bf16.msra.mxu0 0
    %204 = vmatprep.subr.bf16.mxu0 0
    %205 = vmatpush1.bf16.msra.mxu0 0
    %206 = vmatprep.subr.bf16.mxu0 0
    %207 = vmatpush1.bf16.msra.mxu0 0
    %208 = vmatprep.subr.bf16.mxu0 0
    %209 = vmatpush1.bf16.msra.mxu0 0
    %210 = vmatprep.subr.bf16.mxu0 0
    %211 = vmatpush1.bf16.msra.mxu0 0
    %212 = vmatprep.subr.bf16.mxu0 0
    %213 = vmatpush1.bf16.msra.mxu0 0
    %214 = vmatprep.subr.bf16.mxu0 0
    %215 = vmatpush1.bf16.msra.mxu0 0
    %216 = vmatprep.subr.bf16.mxu0 0
    %217 = vmatpush1.bf16.msra.mxu0 0
    %218 = vmatprep.subr.bf16.mxu0 0
    %219 = vmatpush1.bf16.msra.mxu0 0
    %220 = vmatprep.subr.bf16.mxu0 0
    %221 = vmatpush1.bf16.msra.mxu0 0
    %222 = vmatprep.subr.bf16.mxu0 0
    %223 = vmatpush1.bf16.msra.mxu0 0
    %224 = vmatprep.subr.bf16.mxu0 0
    %225 = vmatpush1.bf16.msra.mxu0 0
    %226 = vmatprep.mubr.bf16.mxu0 0
    %227 = vmatmul.mubr.bf16.gmra.mrb[0].mxu0 %v189
    %v228 = vpop.f32.mrb[0].mxu0
    %v229 = vadd.f32 0.0, %v228
    %v230 = vpop.f32.mrb[0].mxu0
    %v231 = vpop.f32.mrb[0].mxu0
    %v232 = vadd.f32 0.0, %v231
    %v233 = vpop.f32.mrb[0].mxu0
    %234 = vmatprep.mubr.bf16.mxu0 0
    %235 = vmatmul.mubr.bf16.gmra.mrb[0].mxu0 %v192
    %v236 = vpop.f32.mrb[0].mxu0
    %v237 = vadd.f32 0.0, %v236
    %v238 = vpop.f32.mrb[0].mxu0
    %v239 = vpop.f32.mrb[0].mxu0
    %v240 = vadd.f32 0.0, %v239
    %v241 = vpop.f32.mrb[0].mxu0
    %242 = vdwg.mxu0
    %v247 = vunpack.c.l.b16 %v152
    %v248 = vunpack.c.l.b16 %v153
    %v249 = vunpack.c.l.b16 %v154
    %v250 = vunpack.c.l.b16 %v155
    %v251 = vpack.c.b16 %v248, %v247
    %v252 = vpack.c.b16 %v250, %v249
    %255 = vmatprep.subr.bf16.mxu0 0
    %256 = vmatpush1.bf16.msra.mxu0 %v251
    %257 = vmatprep.subr.bf16.mxu0 0
    %258 = vmatpush1.bf16.msra.mxu0 %v252
    %259 = vmatprep.subr.bf16.mxu0 0
    %260 = vmatpush1.bf16.msra.mxu0 0
    %261 = vmatprep.subr.bf16.mxu0 0
    %262 = vmatpush1.bf16.msra.mxu0 0
    %263 = vmatprep.subr.bf16.mxu0 0
    %264 = vmatpush1.bf16.msra.mxu0 0
    %265 = vmatprep.subr.bf16.mxu0 0
    %266 = vmatpush1.bf16.msra.mxu0 0
    %267 = vmatprep.subr.bf16.mxu0 0
    %268 = vmatpush1.bf16.msra.mxu0 0
    %269 = vmatprep.subr.bf16.mxu0 0
    %270 = vmatpush1.bf16.msra.mxu0 0
    %271 = vmatprep.subr.bf16.mxu0 0
    %272 = vmatpush1.bf16.msra.mxu0 0
    %273 = vmatprep.subr.bf16.mxu0 0
    %274 = vmatpush1.bf16.msra.mxu0 0
    %275 = vmatprep.subr.bf16.mxu0 0
    %276 = vmatpush1.bf16.msra.mxu0 0
    %277 = vmatprep.subr.bf16.mxu0 0
    %278 = vmatpush1.bf16.msra.mxu0 0
    %279 = vmatprep.subr.bf16.mxu0 0
    %280 = vmatpush1.bf16.msra.mxu0 0
    %281 = vmatprep.subr.bf16.mxu0 0
    %282 = vmatpush1.bf16.msra.mxu0 0
    %283 = vmatprep.subr.bf16.mxu0 0
    %284 = vmatpush1.bf16.msra.mxu0 0
    %285 = vmatprep.subr.bf16.mxu0 0
    %286 = vmatpush1.bf16.msra.mxu0 0
    %287 = vmatprep.mubr.bf16.mxu0 0
    %288 = vmatmul.mubr.bf16.gmra.mrb[0].mxu0 %v189
    %v289 = vpop.f32.mrb[0].mxu0
    %v290 = vadd.f32 0.0, %v289
    %v291 = vpop.f32.mrb[0].mxu0
    %v292 = vpop.f32.mrb[0].mxu0
    %v293 = vadd.f32 0.0, %v292
    %v294 = vpop.f32.mrb[0].mxu0
    %295 = vmatprep.mubr.bf16.mxu0 0
    %296 = vmatmul.mubr.bf16.gmra.mrb[0].mxu0 %v192
    %v297 = vpop.f32.mrb[0].mxu0
    %v298 = vadd.f32 0.0, %v297
    %v299 = vpop.f32.mrb[0].mxu0
    %v300 = vpop.f32.mrb[0].mxu0
    %v301 = vadd.f32 0.0, %v300
    %v302 = vpop.f32.mrb[0].mxu0
    %303 = vdwg.mxu0
    %v308 = vunpack.c.l.b16 %v156
    %v309 = vunpack.c.l.b16 %v157
    %v310 = vunpack.c.l.b16 %v158
    %v311 = vunpack.c.l.b16 %v159
    %v312 = vpack.c.b16 %v309, %v308
    %v313 = vpack.c.b16 %v311, %v310
    %316 = vmatprep.subr.bf16.mxu0 0
    %317 = vmatpush1.bf16.msra.mxu0 %v312
    %318 = vmatprep.subr.bf16.mxu0 0
    %319 = vmatpush1.bf16.msra.mxu0 %v313
    %320 = vmatprep.subr.bf16.mxu0 0
    %321 = vmatpush1.bf16.msra.mxu0 0
    %322 = vmatprep.subr.bf16.mxu0 0
    %323 = vmatpush1.bf16.msra.mxu0 0
    %324 = vmatprep.subr.bf16.mxu0 0
    %325 = vmatpush1.bf16.msra.mxu0 0
    %326 = vmatprep.subr.bf16.mxu0 0
    %327 = vmatpush1.bf16.msra.mxu0 0
    %328 = vmatprep.subr.bf16.mxu0 0
    %329 = vmatpush1.bf16.msra.mxu0 0
    %330 = vmatprep.subr.bf16.mxu0 0
    %331 = vmatpush1.bf16.msra.mxu0 0
    %332 = vmatprep.subr.bf16.mxu0 0
    %333 = vmatpush1.bf16.msra.mxu0 0
    %334 = vmatprep.subr.bf16.mxu0 0
    %335 = vmatpush1.bf16.msra.mxu0 0
    %336 = vmatprep.subr.bf16.mxu0 0
    %337 = vmatpush1.bf16.msra.mxu0 0
    %338 = vmatprep.subr.bf16.mxu0 0
    %339 = vmatpush1.bf16.msra.mxu0 0
    %340 = vmatprep.subr.bf16.mxu0 0
    %341 = vmatpush1.bf16.msra.mxu0 0
    %342 = vmatprep.subr.bf16.mxu0 0
    %343 = vmatpush1.bf16.msra.mxu0 0
    %344 = vmatprep.subr.bf16.mxu0 0
    %345 = vmatpush1.bf16.msra.mxu0 0
    %346 = vmatprep.subr.bf16.mxu0 0
    %347 = vmatpush1.bf16.msra.mxu0 0
    %348 = vmatprep.mubr.bf16.mxu0 0
    %349 = vmatmul.mubr.bf16.gmra.mrb[0].mxu0 %v189
    %v350 = vpop.f32.mrb[0].mxu0
    %v351 = vadd.f32 0.0, %v350
    %v352 = vpop.f32.mrb[0].mxu0
    %v353 = vpop.f32.mrb[0].mxu0
    %v354 = vadd.f32 0.0, %v353
    %v355 = vpop.f32.mrb[0].mxu0
    %356 = vmatprep.mubr.bf16.mxu0 0
    %357 = vmatmul.mubr.bf16.gmra.mrb[0].mxu0 %v192
    %v358 = vpop.f32.mrb[0].mxu0
    %v359 = vadd.f32 0.0, %v358
    %v360 = vpop.f32.mrb[0].mxu0
    %v361 = vpop.f32.mrb[0].mxu0
    %v362 = vadd.f32 0.0, %v361
    %v363 = vpop.f32.mrb[0].mxu0
    %364 = vdwg.mxu0
    %vm369 = vcmask 1046528
    %v370 = vrot.slane %v290, 1
    %v371 = vrot.slane %v293, 1
    %v372 = vsel %vm369, %v370, %v371
    %v373 = vrot.slane %v298, 1
    %v374 = vrot.slane %v301, 1
    %v375 = vsel %vm369, %v373, %v374
    %v380 = vadd.f32 %v229, %v372
    %v381 = vadd.f32 %v232, %v371
    %v382 = vadd.f32 %v237, %v375
    %v383 = vadd.f32 %v240, %v374
    %vm388 = vcmask 1045504
    %v389 = vrot.slane %v351, 2
    %v390 = vrot.slane %v354, 2
    %v391 = vsel %vm388, %v389, %v390
    %v392 = vrot.slane %v359, 2
    %v393 = vrot.slane %v362, 2
    %v394 = vsel %vm388, %v392, %v393
    %v399 = vadd.f32 %v380, %v391
    %v400 = vadd.f32 %v381, %v390
    %v401 = vadd.f32 %v382, %v394
    %v402 = vadd.f32 %v383, %v393
    %v404 = vlaneseq
    %v405 = vshrl.u32 %v404, 7
    %v406 = vsub.s32 0, %v405
    %v407 = vrot.slane %v160, %v406
    %v409 = vadd.f32 %v399, %v407
    %v410 = vadd.f32 %v400, %v407
    %v411 = vadd.f32 %v401, %v407
    %v412 = vadd.f32 %v402, %v407
    %v413 = vmax.f32 %v409, 0.0
    %v414 = vmax.f32 %v410, 0.0
    %v415 = vmax.f32 %v411, 0.0
    %v416 = vmax.f32 %v412, 0.0
    %v417 = vlaneseq
    %v418 = vshrl.u32 %v417, 7
    %v419 = vadd.s32 %v418, 8
    %vm420 = vcmp.lt.s32.totalorder %v418, 6
    %vm421 = vcmp.lt.s32.totalorder %v419, 6
    %v422 = vsel %vm420, %v413, 0.0
    %v423 = vsel %vm421, %v414, 0.0
    %v424 = vsel %vm420, %v415, 0.0
    %v425 = vsel %vm421, %v416, 0.0
    %v426 = vsel %vm187, %v422, -inf
    %vm427 = vcmask 259072
    %v428 = vsel %vm427, %v423, -inf
    %v429 = vmax.f32 %v426, %v428
    %v430 = vrot.slane %v429, 4
    %v431 = vmax.f32 %v429, %v430
    %v432 = vrot.slane %v431, 2
    %v433 = vmax.f32 %v431, %v432
    %v434 = vrot.slane %v433, 1
    %v435 = vmax.f32 %v433, %v434
    %v436 = vsel %vm187, %v424, -inf
    %v437 = vsel %vm427, %v425, -inf
    %v438 = vmax.f32 %v436, %v437
    %v439 = vrot.slane %v438, 4
    %v440 = vmax.f32 %v438, %v439
    %v441 = vrot.slane %v440, 2
    %v442 = vmax.f32 %v440, %v441
    %v443 = vrot.slane %v442, 1
    %v444 = vmax.f32 %v442, %v443
    %v445 = vpack.c.bf16 %v435, %v435
    %v446 = vpack.c.bf16 %v444, %v444
    %v447 = vld [vmem:[#allocation11] sm:$0xf]
    %v448 = vld [vmem:[#allocation11 + $0x4] sm:$0xf]
    %v449 = vld [vmem:[#allocation11 + $0x8] sm:$0xf]
    %v450 = vld [vmem:[#allocation11 + $0xc] sm:$0xf]
    %v451 = vld [vmem:[%s8] sm:$0x1]
    %v453 = vlaneseq
    %v454 = vshrl.u32 %v453, 7
    %v455 = vsub.s32 0, %v454
    %v456 = vrot.slane %v451, %v455
    %v460 = vunpack.c.l.b16 %v445
    %v461 = vunpack.c.l.b16 %v446
    %vm462 = vcmask 1041409
    %v463 = vsel %vm462, %v461, %v460
    %v464 = vpack.c.b16 %v463, %v463
    %v469 = vunpack.c.l.b16 %v447
    %v470 = vunpack.c.l.b16 %v448
    %v471 = vunpack.c.l.b16 %v449
    %v472 = vunpack.c.l.b16 %v450
    %v473 = vpack.c.b16 %v470, %v469
    %v474 = vpack.c.b16 %v472, %v471
    %v478 = vsel %vm187, %v464, 0
    %480 = vmatprep.subr.bf16.mxu0 0
    %481 = vmatpush1.bf16.msra.mxu0 %v473
    %482 = vmatprep.subr.bf16.mxu0 0
    %483 = vmatpush1.bf16.msra.mxu0 %v474
    %484 = vmatprep.subr.bf16.mxu0 0
    %485 = vmatpush1.bf16.msra.mxu0 0
    %486 = vmatprep.subr.bf16.mxu0 0
    %487 = vmatpush1.bf16.msra.mxu0 0
    %488 = vmatprep.subr.bf16.mxu0 0
    %489 = vmatpush1.bf16.msra.mxu0 0
    %490 = vmatprep.subr.bf16.mxu0 0
    %491 = vmatpush1.bf16.msra.mxu0 0
    %492 = vmatprep.subr.bf16.mxu0 0
    %493 = vmatpush1.bf16.msra.mxu0 0
    %494 = vmatprep.subr.bf16.mxu0 0
    %495 = vmatpush1.bf16.msra.mxu0 0
    %496 = vmatprep.subr.bf16.mxu0 0
    %497 = vmatpush1.bf16.msra.mxu0 0
    %498 = vmatprep.subr.bf16.mxu0 0
    %499 = vmatpush1.bf16.msra.mxu0 0
    %500 = vmatprep.subr.bf16.mxu0 0
    %501 = vmatpush1.bf16.msra.mxu0 0
    %502 = vmatprep.subr.bf16.mxu0 0
    %503 = vmatpush1.bf16.msra.mxu0 0
    %504 = vmatprep.subr.bf16.mxu0 0
    %505 = vmatpush1.bf16.msra.mxu0 0
    %506 = vmatprep.subr.bf16.mxu0 0
    %507 = vmatpush1.bf16.msra.mxu0 0
    %508 = vmatprep.subr.bf16.mxu0 0
    %509 = vmatpush1.bf16.msra.mxu0 0
    %510 = vmatprep.subr.bf16.mxu0 0
    %511 = vmatpush1.bf16.msra.mxu0 0
    %512 = vmatprep.mubr.bf16.mxu0 0
    %513 = vmatmul.mubr.bf16.gmra.mrb[0].mxu0 %v478
    %v514 = vpop.f32.mrb[0].mxu0
    %v515 = vadd.f32 %v456, %v514
    %v516 = vpop.f32.mrb[0].mxu0
    %v517 = vpop.f32.mrb[0].mxu0
    %v518 = vpop.f32.mrb[0].mxu0
    %519 = vdwg.mxu0
    %v520 = vld [vmem:[#allocation5] sm:$0xf]
    %v521 = vld [vmem:[#allocation5 + $0x4] sm:$0xf]
    %v522 = vld [vmem:[#allocation5 + $0x8] sm:$0xf]
    %v523 = vld [vmem:[#allocation5 + $0xc] sm:$0xf]
    %v528 = vunpack.c.l.b16 %v520
    %v529 = vunpack.c.l.b16 %v521
    %v530 = vunpack.c.l.b16 %v522
    %v531 = vunpack.c.l.b16 %v523
    %v532 = vpack.c.b16 %v529, %v528
    %v533 = vpack.c.b16 %v531, %v530
    %v535 = vsel %vm187, %v532, 0
    %v538 = vsel %vm187, %v533, 0
    %540 = vmatprep.subr.bf16.mxu0 0
    %541 = vmatpush1.bf16.msra.mxu0 %v183
    %542 = vmatprep.subr.bf16.mxu0 0
    %543 = vmatpush1.bf16.msra.mxu0 %v184
    %544 = vmatprep.subr.bf16.mxu0 0
    %545 = vmatpush1.bf16.msra.mxu0 0
    %546 = vmatprep.subr.bf16.mxu0 0
    %547 = vmatpush1.bf16.msra.mxu0 0
    %548 = vmatprep.subr.bf16.mxu0 0
    %549 = vmatpush1.bf16.msra.mxu0 0
    %550 = vmatprep.subr.bf16.mxu0 0
    %551 = vmatpush1.bf16.msra.mxu0 0
    %552 = vmatprep.subr.bf16.mxu0 0
    %553 = vmatpush1.bf16.msra.mxu0 0
    %554 = vmatprep.subr.bf16.mxu0 0
    %555 = vmatpush1.bf16.msra.mxu0 0
    %556 = vmatprep.subr.bf16.mxu0 0
    %557 = vmatpush1.bf16.msra.mxu0 0
    %558 = vmatprep.subr.bf16.mxu0 0
    %559 = vmatpush1.bf16.msra.mxu0 0
    %560 = vmatprep.subr.bf16.mxu0 0
    %561 = vmatpush1.bf16.msra.mxu0 0
    %562 = vmatprep.subr.bf16.mxu0 0
    %563 = vmatpush1.bf16.msra.mxu0 0
    %564 = vmatprep.subr.bf16.mxu0 0
    %565 = vmatpush1.bf16.msra.mxu0 0
    %566 = vmatprep.subr.bf16.mxu0 0
    %567 = vmatpush1.bf16.msra.mxu0 0
    %568 = vmatprep.subr.bf16.mxu0 0
    %569 = vmatpush1.bf16.msra.mxu0 0
    %570 = vmatprep.subr.bf16.mxu0 0
    %571 = vmatpush1.bf16.msra.mxu0 0
    %572 = vmatprep.mubr.bf16.mxu0 0
    %573 = vmatmul.mubr.bf16.gmra.mrb[0].mxu0 %v535
    %v574 = vpop.f32.mrb[0].mxu0
    %v575 = vadd.f32 0.0, %v574
    %v576 = vpop.f32.mrb[0].mxu0
    %v577 = vpop.f32.mrb[0].mxu0
    %v578 = vadd.f32 0.0, %v577
    %v579 = vpop.f32.mrb[0].mxu0
    %580 = vmatprep.mubr.bf16.mxu0 0
    %581 = vmatmul.mubr.bf16.gmra.mrb[0].mxu0 %v538
    %v582 = vpop.f32.mrb[0].mxu0
    %v583 = vadd.f32 0.0, %v582
    %v584 = vpop.f32.mrb[0].mxu0
    %v585 = vpop.f32.mrb[0].mxu0
    %v586 = vadd.f32 0.0, %v585
    %v587 = vpop.f32.mrb[0].mxu0
    %588 = vdwg.mxu0
    %589 = vmatprep.subr.bf16.mxu0 0
    %590 = vmatpush1.bf16.msra.mxu0 %v251
    %591 = vmatprep.subr.bf16.mxu0 0
    %592 = vmatpush1.bf16.msra.mxu0 %v252
    %593 = vmatprep.subr.bf16.mxu0 0
    %594 = vmatpush1.bf16.msra.mxu0 0
    %595 = vmatprep.subr.bf16.mxu0 0
    %596 = vmatpush1.bf16.msra.mxu0 0
    %597 = vmatprep.subr.bf16.mxu0 0
    %598 = vmatpush1.bf16.msra.mxu0 0
    %599 = vmatprep.subr.bf16.mxu0 0
    %600 = vmatpush1.bf16.msra.mxu0 0
    %601 = vmatprep.subr.bf16.mxu0 0
    %602 = vmatpush1.bf16.msra.mxu0 0
    %603 = vmatprep.subr.bf16.mxu0 0
    %604 = vmatpush1.bf16.msra.mxu0 0
    %605 = vmatprep.subr.bf16.mxu0 0
    %606 = vmatpush1.bf16.msra.mxu0 0
    %607 = vmatprep.subr.bf16.mxu0 0
    %608 = vmatpush1.bf16.msra.mxu0 0
    %609 = vmatprep.subr.bf16.mxu0 0
    %610 = vmatpush1.bf16.msra.mxu0 0
    %611 = vmatprep.subr.bf16.mxu0 0
    %612 = vmatpush1.bf16.msra.mxu0 0
    %613 = vmatprep.subr.bf16.mxu0 0
    %614 = vmatpush1.bf16.msra.mxu0 0
    %615 = vmatprep.subr.bf16.mxu0 0
    %616 = vmatpush1.bf16.msra.mxu0 0
    %617 = vmatprep.subr.bf16.mxu0 0
    %618 = vmatpush1.bf16.msra.mxu0 0
    %619 = vmatprep.subr.bf16.mxu0 0
    %620 = vmatpush1.bf16.msra.mxu0 0
    %621 = vmatprep.mubr.bf16.mxu0 0
    %622 = vmatmul.mubr.bf16.gmra.mrb[0].mxu0 %v535
    %v623 = vpop.f32.mrb[0].mxu0
    %v624 = vadd.f32 0.0, %v623
    %v625 = vpop.f32.mrb[0].mxu0
    %v626 = vpop.f32.mrb[0].mxu0
    %v627 = vadd.f32 0.0, %v626
    %v628 = vpop.f32.mrb[0].mxu0
    %629 = vmatprep.mubr.bf16.mxu0 0
    %630 = vmatmul.mubr.bf16.gmra.mrb[0].mxu0 %v538
    %v631 = vpop.f32.mrb[0].mxu0
    %v632 = vadd.f32 0.0, %v631
    %v633 = vpop.f32.mrb[0].mxu0
    %v634 = vpop.f32.mrb[0].mxu0
    %v635 = vadd.f32 0.0, %v634
    %v636 = vpop.f32.mrb[0].mxu0
    %637 = vdwg.mxu0
    %638 = vmatprep.subr.bf16.mxu0 0
    %639 = vmatpush1.bf16.msra.mxu0 %v312
    %640 = vmatprep.subr.bf16.mxu0 0
    %641 = vmatpush1.bf16.msra.mxu0 %v313
    %642 = vmatprep.subr.bf16.mxu0 0
    %643 = vmatpush1.bf16.msra.mxu0 0
    %644 = vmatprep.subr.bf16.mxu0 0
    %645 = vmatpush1.bf16.msra.mxu0 0
    %646 = vmatprep.subr.bf16.mxu0 0
    %647 = vmatpush1.bf16.msra.mxu0 0
    %648 = vmatprep.subr.bf16.mxu0 0
    %649 = vmatpush1.bf16.msra.mxu0 0
    %650 = vmatprep.subr.bf16.mxu0 0
    %651 = vmatpush1.bf16.msra.mxu0 0
    %652 = vmatprep.subr.bf16.mxu0 0
    %653 = vmatpush1.bf16.msra.mxu0 0
    %654 = vmatprep.subr.bf16.mxu0 0
    %655 = vmatpush1.bf16.msra.mxu0 0
    %656 = vmatprep.subr.bf16.mxu0 0
    %657 = vmatpush1.bf16.msra.mxu0 0
    %658 = vmatprep.subr.bf16.mxu0 0
    %659 = vmatpush1.bf16.msra.mxu0 0
    %660 = vmatprep.subr.bf16.mxu0 0
    %661 = vmatpush1.bf16.msra.mxu0 0
    %662 = vmatprep.subr.bf16.mxu0 0
    %663 = vmatpush1.bf16.msra.mxu0 0
    %664 = vmatprep.subr.bf16.mxu0 0
    %665 = vmatpush1.bf16.msra.mxu0 0
    %666 = vmatprep.subr.bf16.mxu0 0
    %667 = vmatpush1.bf16.msra.mxu0 0
    %668 = vmatprep.subr.bf16.mxu0 0
    %669 = vmatpush1.bf16.msra.mxu0 0
    %670 = vmatprep.mubr.bf16.mxu0 0
    %671 = vmatmul.mubr.bf16.gmra.mrb[0].mxu0 %v535
    %v672 = vpop.f32.mrb[0].mxu0
    %v673 = vadd.f32 0.0, %v672
    %v674 = vpop.f32.mrb[0].mxu0
    %v675 = vpop.f32.mrb[0].mxu0
    %v676 = vadd.f32 0.0, %v675
    %v677 = vpop.f32.mrb[0].mxu0
    %678 = vmatprep.mubr.bf16.mxu0 0
    %679 = vmatmul.mubr.bf16.gmra.mrb[0].mxu0 %v538
    %v680 = vpop.f32.mrb[0].mxu0
    %v681 = vadd.f32 0.0, %v680
    %v682 = vpop.f32.mrb[0].mxu0
    %v683 = vpop.f32.mrb[0].mxu0
    %v684 = vadd.f32 0.0, %v683
    %v685 = vpop.f32.mrb[0].mxu0
    %686 = vdwg.mxu0
    %v691 = vrot.slane %v624, 1
    %v692 = vrot.slane %v627, 1
    %v693 = vsel %vm369, %v691, %v692
    %v694 = vrot.slane %v632, 1
    %v695 = vrot.slane %v635, 1
    %v696 = vsel %vm369, %v694, %v695
    %v701 = vadd.f32 %v575, %v693
    %v702 = vadd.f32 %v578, %v692
    %v703 = vadd.f32 %v583, %v696
    %v704 = vadd.f32 %v586, %v695
    %v709 = vrot.slane %v673, 2
    %v710 = vrot.slane %v676, 2
    %v711 = vsel %vm388, %v709, %v710
    %v712 = vrot.slane %v681, 2
    %v713 = vrot.slane %v684, 2
    %v714 = vsel %vm388, %v712, %v713
    %v719 = vadd.f32 %v701, %v711
    %v720 = vadd.f32 %v702, %v710
    %v721 = vadd.f32 %v703, %v714
    %v722 = vadd.f32 %v704, %v713
    %v723 = vadd.f32 %v719, %v407
    %v724 = vadd.f32 %v720, %v407
    %v725 = vadd.f32 %v721, %v407
    %v726 = vadd.f32 %v722, %v407
    %v727 = vmax.f32 %v723, 0.0
    %v728 = vmax.f32 %v724, 0.0
    %v729 = vmax.f32 %v725, 0.0
    %v730 = vmax.f32 %v726, 0.0
    %vm731 = vcmp.lt.s32.totalorder %v418, 8
    %vm732 = vcmp.lt.s32.totalorder %v419, 8
    %v733 = vsel %vm731, %v727, 0.0
    %v734 = vsel %vm732, %v728, 0.0
    %v735 = vsel %vm731, %v729, 0.0
    %v736 = vsel %vm732, %v730, 0.0
    %v737 = vsel %vm187, %v733, -inf
    %v738 = vsel %vm427, %v734, -inf
    %v739 = vmax.f32 %v737, %v738
    %v740 = vrot.slane %v739, 4
    %v741 = vmax.f32 %v739, %v740
    %v742 = vrot.slane %v741, 2
    %v743 = vmax.f32 %v741, %v742
    %v744 = vrot.slane %v743, 1
    %v745 = vmax.f32 %v743, %v744
    %v746 = vsel %vm187, %v735, -inf
    %v747 = vsel %vm427, %v736, -inf
    %v748 = vmax.f32 %v746, %v747
    %v749 = vrot.slane %v748, 4
    %v750 = vmax.f32 %v748, %v749
    %v751 = vrot.slane %v750, 2
    %v752 = vmax.f32 %v750, %v751
    %v753 = vrot.slane %v752, 1
    %v754 = vmax.f32 %v752, %v753
    %v755 = vpack.c.bf16 %v745, %v745
    %v756 = vpack.c.bf16 %v754, %v754
    %v757 = vld [vmem:[%s9] sm:$0xf]
    %v758 = vld [vmem:[%s9 + $0x4] sm:$0xf]
    %v759 = vld [vmem:[%s9 + $0x8] sm:$0xf]
    %v760 = vld [vmem:[%s9 + $0xc] sm:$0xf]
    %v761 = vld [vmem:[%s10] sm:$0x1]
    %v763 = vlaneseq
    %v764 = vshrl.u32 %v763, 7
    %v765 = vsub.s32 0, %v764
    %v766 = vrot.slane %v761, %v765
    %v770 = vunpack.c.l.b16 %v755
    %v771 = vunpack.c.l.b16 %v756
    %v772 = vsel %vm462, %v771, %v770
    %v773 = vpack.c.b16 %v772, %v772
    %v778 = vunpack.c.l.b16 %v757
    %v779 = vunpack.c.l.b16 %v758
    %v780 = vunpack.c.l.b16 %v759
    %v781 = vunpack.c.l.b16 %v760
    %v782 = vpack.c.b16 %v779, %v778
    %v783 = vpack.c.b16 %v781, %v780
    %v787 = vsel %vm187, %v773, 0
    %789 = vmatprep.subr.bf16.mxu0 0
    %790 = vmatpush1.bf16.msra.mxu0 %v782
    %791 = vmatprep.subr.bf16.mxu0 0
    %792 = vmatpush1.bf16.msra.mxu0 %v783
    %793 = vmatprep.subr.bf16.mxu0 0
    %794 = vmatpush1.bf16.msra.mxu0 0
    %795 = vmatprep.subr.bf16.mxu0 0
    %796 = vmatpush1.bf16.msra.mxu0 0
    %797 = vmatprep.subr.bf16.mxu0 0
    %798 = vmatpush1.bf16.msra.mxu0 0
    %799 = vmatprep.subr.bf16.mxu0 0
    %800 = vmatpush1.bf16.msra.mxu0 0
    %801 = vmatprep.subr.bf16.mxu0 0
    %802 = vmatpush1.bf16.msra.mxu0 0
    %803 = vmatprep.subr.bf16.mxu0 0
    %804 = vmatpush1.bf16.msra.mxu0 0
    %805 = vmatprep.subr.bf16.mxu0 0
    %806 = vmatpush1.bf16.msra.mxu0 0
    %807 = vmatprep.subr.bf16.mxu0 0
    %808 = vmatpush1.bf16.msra.mxu0 0
    %809 = vmatprep.subr.bf16.mxu0 0
    %810 = vmatpush1.bf16.msra.mxu0 0
    %811 = vmatprep.subr.bf16.mxu0 0
    %812 = vmatpush1.bf16.msra.mxu0 0
    %813 = vmatprep.subr.bf16.mxu0 0
    %814 = vmatpush1.bf16.msra.mxu0 0
    %815 = vmatprep.subr.bf16.mxu0 0
    %816 = vmatpush1.bf16.msra.mxu0 0
    %817 = vmatprep.subr.bf16.mxu0 0
    %818 = vmatpush1.bf16.msra.mxu0 0
    %819 = vmatprep.subr.bf16.mxu0 0
    %820 = vmatpush1.bf16.msra.mxu0 0
    %821 = vmatprep.mubr.bf16.mxu0 0
    %822 = vmatmul.mubr.bf16.gmra.mrb[0].mxu0 %v787
    %v823 = vpop.f32.mrb[0].mxu0
    %v824 = vadd.f32 %v766, %v823
    %v825 = vpop.f32.mrb[0].mxu0
    %v826 = vpop.f32.mrb[0].mxu0
    %v827 = vpop.f32.mrb[0].mxu0
    %828 = vdwg.mxu0
    %v829 = vld [vmem:[#allocation7] sm:$0xf]
    %v830 = vld [vmem:[#allocation7 + $0x4] sm:$0xf]
    %v831 = vld [vmem:[#allocation7 + $0x8] sm:$0xf]
    %v832 = vld [vmem:[#allocation7 + $0xc] sm:$0xf]
    %v837 = vunpack.c.l.b16 %v829
    %v838 = vunpack.c.l.b16 %v830
    %v839 = vunpack.c.l.b16 %v831
    %v840 = vunpack.c.l.b16 %v832
    %v841 = vpack.c.b16 %v838, %v837
    %v842 = vpack.c.b16 %v840, %v839
    %v844 = vsel %vm187, %v841, 0
    %v847 = vsel %vm187, %v842, 0
    %849 = vmatprep.subr.bf16.mxu0 0
    %850 = vmatpush1.bf16.msra.mxu0 %v183
    %851 = vmatprep.subr.bf16.mxu0 0
    %852 = vmatpush1.bf16.msra.mxu0 %v184
    %853 = vmatprep.subr.bf16.mxu0 0
    %854 = vmatpush1.bf16.msra.mxu0 0
    %855 = vmatprep.subr.bf16.mxu0 0
    %856 = vmatpush1.bf16.msra.mxu0 0
    %857 = vmatprep.subr.bf16.mxu0 0
    %858 = vmatpush1.bf16.msra.mxu0 0
    %859 = vmatprep.subr.bf16.mxu0 0
    %860 = vmatpush1.bf16.msra.mxu0 0
    %861 = vmatprep.subr.bf16.mxu0 0
    %862 = vmatpush1.bf16.msra.mxu0 0
    %863 = vmatprep.subr.bf16.mxu0 0
    %864 = vmatpush1.bf16.msra.mxu0 0
    %865 = vmatprep.subr.bf16.mxu0 0
    %866 = vmatpush1.bf16.msra.mxu0 0
    %867 = vmatprep.subr.bf16.mxu0 0
    %868 = vmatpush1.bf16.msra.mxu0 0
    %869 = vmatprep.subr.bf16.mxu0 0
    %870 = vmatpush1.bf16.msra.mxu0 0
    %871 = vmatprep.subr.bf16.mxu0 0
    %872 = vmatpush1.bf16.msra.mxu0 0
    %873 = vmatprep.subr.bf16.mxu0 0
    %874 = vmatpush1.bf16.msra.mxu0 0
    %875 = vmatprep.subr.bf16.mxu0 0
    %876 = vmatpush1.bf16.msra.mxu0 0
    %877 = vmatprep.subr.bf16.mxu0 0
    %878 = vmatpush1.bf16.msra.mxu0 0
    %879 = vmatprep.subr.bf16.mxu0 0
    %880 = vmatpush1.bf16.msra.mxu0 0
    %881 = vmatprep.mubr.bf16.mxu0 0
    %882 = vmatmul.mubr.bf16.gmra.mrb[0].mxu0 %v844
    %v883 = vpop.f32.mrb[0].mxu0
    %v884 = vadd.f32 0.0, %v883
    %v885 = vpop.f32.mrb[0].mxu0
    %v886 = vpop.f32.mrb[0].mxu0
    %v887 = vadd.f32 0.0, %v886
    %v888 = vpop.f32.mrb[0].mxu0
    %889 = vmatprep.mubr.bf16.mxu0 0
    %890 = vmatmul.mubr.bf16.gmra.mrb[0].mxu0 %v847
    %v891 = vpop.f32.mrb[0].mxu0
    %v892 = vadd.f32 0.0, %v891
    %v893 = vpop.f32.mrb[0].mxu0
    %v894 = vpop.f32.mrb[0].mxu0
    %v895 = vadd.f32 0.0, %v894
    %v896 = vpop.f32.mrb[0].mxu0
    %897 = vdwg.mxu0
    %898 = vmatprep.subr.bf16.mxu0 0
    %899 = vmatpush1.bf16.msra.mxu0 %v251
    %900 = vmatprep.subr.bf16.mxu0 0
    %901 = vmatpush1.bf16.msra.mxu0 %v252
    %902 = vmatprep.subr.bf16.mxu0 0
    %903 = vmatpush1.bf16.msra.mxu0 0
    %904 = vmatprep.subr.bf16.mxu0 0
    %905 = vmatpush1.bf16.msra.mxu0 0
    %906 = vmatprep.subr.bf16.mxu0 0
    %907 = vmatpush1.bf16.msra.mxu0 0
    %908 = vmatprep.subr.bf16.mxu0 0
    %909 = vmatpush1.bf16.msra.mxu0 0
    %910 = vmatprep.subr.bf16.mxu0 0
    %911 = vmatpush1.bf16.msra.mxu0 0
    %912 = vmatprep.subr.bf16.mxu0 0
    %913 = vmatpush1.bf16.msra.mxu0 0
    %914 = vmatprep.subr.bf16.mxu0 0
    %915 = vmatpush1.bf16.msra.mxu0 0
    %916 = vmatprep.subr.bf16.mxu0 0
    %917 = vmatpush1.bf16.msra.mxu0 0
    %918 = vmatprep.subr.bf16.mxu0 0
    %919 = vmatpush1.bf16.msra.mxu0 0
    %920 = vmatprep.subr.bf16.mxu0 0
    %921 = vmatpush1.bf16.msra.mxu0 0
    %922 = vmatprep.subr.bf16.mxu0 0
    %923 = vmatpush1.bf16.msra.mxu0 0
    %924 = vmatprep.subr.bf16.mxu0 0
    %925 = vmatpush1.bf16.msra.mxu0 0
    %926 = vmatprep.subr.bf16.mxu0 0
    %927 = vmatpush1.bf16.msra.mxu0 0
    %928 = vmatprep.subr.bf16.mxu0 0
    %929 = vmatpush1.bf16.msra.mxu0 0
    %930 = vmatprep.mubr.bf16.mxu0 0
    %931 = vmatmul.mubr.bf16.gmra.mrb[0].mxu0 %v844
    %v932 = vpop.f32.mrb[0].mxu0
    %v933 = vadd.f32 0.0, %v932
    %v934 = vpop.f32.mrb[0].mxu0
    %v935 = vpop.f32.mrb[0].mxu0
    %v936 = vadd.f32 0.0, %v935
    %v937 = vpop.f32.mrb[0].mxu0
    %938 = vmatprep.mubr.bf16.mxu0 0
    %939 = vmatmul.mubr.bf16.gmra.mrb[0].mxu0 %v847
    %v940 = vpop.f32.mrb[0].mxu0
    %v941 = vadd.f32 0.0, %v940
    %v942 = vpop.f32.mrb[0].mxu0
    %v943 = vpop.f32.mrb[0].mxu0
    %v944 = vadd.f32 0.0, %v943
    %v945 = vpop.f32.mrb[0].mxu0
    %946 = vdwg.mxu0
    %947 = vmatprep.subr.bf16.mxu0 0
    %948 = vmatpush1.bf16.msra.mxu0 %v312
    %949 = vmatprep.subr.bf16.mxu0 0
    %950 = vmatpush1.bf16.msra.mxu0 %v313
    %951 = vmatprep.subr.bf16.mxu0 0
    %952 = vmatpush1.bf16.msra.mxu0 0
    %953 = vmatprep.subr.bf16.mxu0 0
    %954 = vmatpush1.bf16.msra.mxu0 0
    %955 = vmatprep.subr.bf16.mxu0 0
    %956 = vmatpush1.bf16.msra.mxu0 0
    %957 = vmatprep.subr.bf16.mxu0 0
    %958 = vmatpush1.bf16.msra.mxu0 0
    %959 = vmatprep.subr.bf16.mxu0 0
    %960 = vmatpush1.bf16.msra.mxu0 0
    %961 = vmatprep.subr.bf16.mxu0 0
    %962 = vmatpush1.bf16.msra.mxu0 0
    %963 = vmatprep.subr.bf16.mxu0 0
    %964 = vmatpush1.bf16.msra.mxu0 0
    %965 = vmatprep.subr.bf16.mxu0 0
    %966 = vmatpush1.bf16.msra.mxu0 0
    %967 = vmatprep.subr.bf16.mxu0 0
    %968 = vmatpush1.bf16.msra.mxu0 0
    %969 = vmatprep.subr.bf16.mxu0 0
    %970 = vmatpush1.bf16.msra.mxu0 0
    %971 = vmatprep.subr.bf16.mxu0 0
    %972 = vmatpush1.bf16.msra.mxu0 0
    %973 = vmatprep.subr.bf16.mxu0 0
    %974 = vmatpush1.bf16.msra.mxu0 0
    %975 = vmatprep.subr.bf16.mxu0 0
    %976 = vmatpush1.bf16.msra.mxu0 0
    %977 = vmatprep.subr.bf16.mxu0 0
    %978 = vmatpush1.bf16.msra.mxu0 0
    %979 = vmatprep.mubr.bf16.mxu0 0
    %980 = vmatmul.mubr.bf16.gmra.mrb[0].mxu0 %v844
    %v981 = vpop.f32.mrb[0].mxu0
    %v982 = vadd.f32 0.0, %v981
    %v983 = vpop.f32.mrb[0].mxu0
    %v984 = vpop.f32.mrb[0].mxu0
    %v985 = vadd.f32 0.0, %v984
    %v986 = vpop.f32.mrb[0].mxu0
    %987 = vmatprep.mubr.bf16.mxu0 0
    %988 = vmatmul.mubr.bf16.gmra.mrb[0].mxu0 %v847
    %v989 = vpop.f32.mrb[0].mxu0
    %v990 = vadd.f32 0.0, %v989
    %v991 = vpop.f32.mrb[0].mxu0
    %v992 = vpop.f32.mrb[0].mxu0
    %v993 = vadd.f32 0.0, %v992
    %v994 = vpop.f32.mrb[0].mxu0
    %995 = vdwg.mxu0
    %v1000 = vrot.slane %v933, 1
    %v1001 = vrot.slane %v936, 1
    %v1002 = vsel %vm369, %v1000, %v1001
    %v1003 = vrot.slane %v941, 1
    %v1004 = vrot.slane %v944, 1
    %v1005 = vsel %vm369, %v1003, %v1004
    %v1010 = vadd.f32 %v884, %v1002
    %v1011 = vadd.f32 %v887, %v1001
    %v1012 = vadd.f32 %v892, %v1005
    %v1013 = vadd.f32 %v895, %v1004
    %v1018 = vrot.slane %v982, 2
    %v1019 = vrot.slane %v985, 2
    %v1020 = vsel %vm388, %v1018, %v1019
    %v1021 = vrot.slane %v990, 2
    %v1022 = vrot.slane %v993, 2
    %v1023 = vsel %vm388, %v1021, %v1022
    %v1028 = vadd.f32 %v1010, %v1020
    %v1029 = vadd.f32 %v1011, %v1019
    %v1030 = vadd.f32 %v1012, %v1023
    %v1031 = vadd.f32 %v1013, %v1022
    %v1032 = vadd.f32 %v1028, %v407
    %v1033 = vadd.f32 %v1029, %v407
    %v1034 = vadd.f32 %v1030, %v407
    %v1035 = vadd.f32 %v1031, %v407
    %v1036 = vmax.f32 %v1032, 0.0
    %v1037 = vmax.f32 %v1033, 0.0
    %v1038 = vmax.f32 %v1034, 0.0
    %v1039 = vmax.f32 %v1035, 0.0
    %vm1040 = vcmp.lt.s32.totalorder %v418, 10
    %vm1041 = vcmp.lt.s32.totalorder %v419, 10
    %v1042 = vsel %vm1040, %v1036, 0.0
    %v1043 = vsel %vm1041, %v1037, 0.0
    %v1044 = vsel %vm1040, %v1038, 0.0
    %v1045 = vsel %vm1041, %v1039, 0.0
    %v1046 = vsel %vm187, %v1042, -inf
    %v1047 = vsel %vm427, %v1043, -inf
    %v1048 = vmax.f32 %v1046, %v1047
    %v1049 = vrot.slane %v1048, 4
    %v1050 = vmax.f32 %v1048, %v1049
    %v1051 = vrot.slane %v1050, 2
    %v1052 = vmax.f32 %v1050, %v1051
    %v1053 = vrot.slane %v1052, 1
    %v1054 = vmax.f32 %v1052, %v1053
    %v1055 = vsel %vm187, %v1044, -inf
    %v1056 = vsel %vm427, %v1045, -inf
    %v1057 = vmax.f32 %v1055, %v1056
    %v1058 = vrot.slane %v1057, 4
    %v1059 = vmax.f32 %v1057, %v1058
    %v1060 = vrot.slane %v1059, 2
    %v1061 = vmax.f32 %v1059, %v1060
    %v1062 = vrot.slane %v1061, 1
    %v1063 = vmax.f32 %v1061, %v1062
    %v1064 = vpack.c.bf16 %v1054, %v1054
    %v1065 = vpack.c.bf16 %v1063, %v1063
    %v1066 = vld [vmem:[#allocation13] sm:$0xf]
    %v1067 = vld [vmem:[#allocation13 + $0x4] sm:$0xf]
    %v1068 = vld [vmem:[#allocation13 + $0x8] sm:$0xf]
    %v1069 = vld [vmem:[#allocation13 + $0xc] sm:$0xf]
    %v1070 = vld [vmem:[%s12] sm:$0x1]
    %v1072 = vlaneseq
    %v1073 = vshrl.u32 %v1072, 7
    %v1074 = vsub.s32 0, %v1073
    %v1075 = vrot.slane %v1070, %v1074
    %v1079 = vunpack.c.l.b16 %v1064
    %v1080 = vunpack.c.l.b16 %v1065
    %v1081 = vsel %vm462, %v1080, %v1079
    %v1082 = vpack.c.b16 %v1081, %v1081
    %v1087 = vunpack.c.l.b16 %v1066
    %v1088 = vunpack.c.l.b16 %v1067
    %v1089 = vunpack.c.l.b16 %v1068
    %v1090 = vunpack.c.l.b16 %v1069
    %v1091 = vpack.c.b16 %v1088, %v1087
    %v1092 = vpack.c.b16 %v1090, %v1089
    %v1096 = vsel %vm187, %v1082, 0
    %1098 = vmatprep.subr.bf16.mxu0 0
    %1099 = vmatpush1.bf16.msra.mxu0 %v1091
    %1100 = vmatprep.subr.bf16.mxu0 0
    %1101 = vmatpush1.bf16.msra.mxu0 %v1092
    %1102 = vmatprep.subr.bf16.mxu0 0
    %1103 = vmatpush1.bf16.msra.mxu0 0
    %1104 = vmatprep.subr.bf16.mxu0 0
    %1105 = vmatpush1.bf16.msra.mxu0 0
    %1106 = vmatprep.subr.bf16.mxu0 0
    %1107 = vmatpush1.bf16.msra.mxu0 0
    %1108 = vmatprep.subr.bf16.mxu0 0
    %1109 = vmatpush1.bf16.msra.mxu0 0
    %1110 = vmatprep.subr.bf16.mxu0 0
    %1111 = vmatpush1.bf16.msra.mxu0 0
    %1112 = vmatprep.subr.bf16.mxu0 0
    %1113 = vmatpush1.bf16.msra.mxu0 0
    %1114 = vmatprep.subr.bf16.mxu0 0
    %1115 = vmatpush1.bf16.msra.mxu0 0
    %1116 = vmatprep.subr.bf16.mxu0 0
    %1117 = vmatpush1.bf16.msra.mxu0 0
    %1118 = vmatprep.subr.bf16.mxu0 0
    %1119 = vmatpush1.bf16.msra.mxu0 0
    %1120 = vmatprep.subr.bf16.mxu0 0
    %1121 = vmatpush1.bf16.msra.mxu0 0
    %1122 = vmatprep.subr.bf16.mxu0 0
    %1123 = vmatpush1.bf16.msra.mxu0 0
    %1124 = vmatprep.subr.bf16.mxu0 0
    %1125 = vmatpush1.bf16.msra.mxu0 0
    %1126 = vmatprep.subr.bf16.mxu0 0
    %1127 = vmatpush1.bf16.msra.mxu0 0
    %1128 = vmatprep.subr.bf16.mxu0 0
    %1129 = vmatpush1.bf16.msra.mxu0 0
    %1130 = vmatprep.mubr.bf16.mxu0 0
    %1131 = vmatmul.mubr.bf16.gmra.mrb[0].mxu0 %v1096
    %v1132 = vpop.f32.mrb[0].mxu0
    %v1133 = vadd.f32 %v1075, %v1132
    %v1134 = vpop.f32.mrb[0].mxu0
    %v1135 = vpop.f32.mrb[0].mxu0
    %v1136 = vpop.f32.mrb[0].mxu0
    %1137 = vdwg.mxu0
    %v1138 = vmul.f32 %v515, %v824
    %vm1139 = vcmask 254976
    %v1140 = vsel %vm1139, %v1138, 0.0
    %1141 = vadd.xlane.f32.xlu0 %v1140
    %v1142 = vpop.xlane.xlu0 %1141
    %v1143 = vmul.f32 %v515, %v515
    %v1144 = vsel %vm1139, %v1143, 0.0
    %1145 = vadd.xlane.f32.xlu0 %v1144
    %v1146 = vpop.xlane.xlu0 %1145
    %v1147 = vrsqrt.pop %v1146
    %v1148 = vmul.f32 %v1146, %v1147
    %vm1149 = vcmp.eq.f32.partialorder %v1146, inf
    %v1150 = vsel %vm1149, %v1146, %v1148
    %vm1151 = vcmp.eq.f32.partialorder %v1146, 0.0
    %v1152 = vand.u32 %v1146, 2147483648
    %v1153 = vsel %vm1151, %v1152, %v1150
    %v1154 = vmax.f32 %v1153, 1e-08
    %v1155 = vmul.f32 %v824, %v824
    %v1156 = vsel %vm1139, %v1155, 0.0
    %1157 = vadd.xlane.f32.xlu0 %v1156
    %v1158 = vpop.xlane.xlu0 %1157
    %v1159 = vrsqrt.pop %v1158
    %v1160 = vmul.f32 %v1158, %v1159
    %vm1161 = vcmp.eq.f32.partialorder %v1158, inf
    %v1162 = vsel %vm1161, %v1158, %v1160
    %vm1163 = vcmp.eq.f32.partialorder %v1158, 0.0
    %v1164 = vand.u32 %v1158, 2147483648
    %v1165 = vsel %vm1163, %v1164, %v1162
    %v1166 = vmax.f32 %v1165, 1e-08
    %v1167 = vmul.f32 %v1154, %v1166
    %v1168 = vrcp.pop %v1167
    %v1169 = vmul.f32 %v1142, %v1168
    %v1170 = vmul.f32 %v515, %v1133
    %v1171 = vsel %vm1139, %v1170, 0.0
    %1172 = vadd.xlane.f32.xlu0 %v1171
    %v1173 = vpop.xlane.xlu0 %1172
    %v1174 = vmul.f32 %v1133, %v1133
    %v1175 = vsel %vm1139, %v1174, 0.0
    %1176 = vadd.xlane.f32.xlu0 %v1175
    %v1177 = vpop.xlane.xlu0 %1176
    %v1178 = vrsqrt.pop %v1177
    %v1179 = vmul.f32 %v1177, %v1178
    %vm1180 = vcmp.eq.f32.partialorder %v1177, inf
    %v1181 = vsel %vm1180, %v1177, %v1179
    %vm1182 = vcmp.eq.f32.partialorder %v1177, 0.0
    %v1183 = vand.u32 %v1177, 2147483648
    %v1184 = vsel %vm1182, %v1183, %v1181
    %v1185 = vmax.f32 %v1184, 1e-08
    %v1186 = vmul.f32 %v1154, %v1185
    %v1187 = vrcp.pop %v1186
    %v1188 = vmul.f32 %v1173, %v1187
    %v1189 = vld [vmem:[%s13] sm:$0x1]
    %v1191 = vlaneseq
    %v1192 = vshrl.u32 %v1191, 7
    %v1193 = vsub.s32 0, %v1192
    %v1194 = vrot.slane %v1189, %v1193
    %v1196 = vmul.f32 %v1169, %v1194
    %v1197 = vmul.f32 %v1188, %v1194
    %1199 = vrot.lane.b32.xlu0 %v1197, 127
    %v1200 = vpop.permute.xlu0 %1199
    %v1202 = vadd.f32 %v1196, %v1200
    %v1203 = vld [vmem:[#allocation2] sm:$0x1]
    %v1205 = vlaneseq
    %v1206 = vshrl.u32 %v1205, 7
    %v1207 = vsub.s32 0, %v1206
    %v1208 = vrot.slane %v1203, %v1207
    %v1210 = vadd.f32 %v1202, %v1208
    %vm1211 = vcmask 1024
    %1212 = vst.msk [vmem:[%s15] sm:$0x3] %vm1211, %v1210
    // Predicated region
    $region90: #{tpu_custom_call.1} parent=1 // pred_check
      _
    $region91: #{tpu_custom_call.1} parent=1 // pred_check_branch
      %1214 = sbr.rel (0) target = $region93
    $region92: #{tpu_custom_call.1} parent=1 // pred_region
      _
    $region93: #{tpu_custom_call.1} parent=1 // pred_fallthru
      _
    // Predicated region
    $region94: #{tpu_custom_call.1} parent=1 // pred_check
      _
    $region95: #{tpu_custom_call.1} parent=1 // pred_check_branch
      %1216 = sbr.rel (0) target = $region97
    $region96: #{tpu_custom_call.1} parent=1 // pred_region
      _
    $region97: #{tpu_custom_call.1} parent=1 // pred_fallthru
      _
    %1217 = vsyncpa [#allocation4], 1
    %1218 = vsyncpa [#allocation6], 1
    %1219 = vsyncpa [#allocation9], 1
    %1220 = vsyncpa [#allocation12], 1

</llo_original>
